<compile_context>
chip_gen: v6e
topology: v6e:2x2x1
jax: 0.10.0
libtpu: 0.0.40
codegen_flags: <defaults>
</compile_context>

<pallas_src>
import functools

import jax
import jax.numpy as jnp
from jax.experimental import pallas as pl
from jax.experimental.pallas import tpu as pltpu

MAX_SEQLEN = 7


def seqenc_kernel(x_ref,
                  w_ih_e_ref, w_hh_e_ref, b_e_ref,
                  w_comb_ref, b_comb_ref,
                  w_hh_d_ref,
                  w_exp_ref, b_exp_ref,
                  out_ref,
                  h_enc_scr, h_dec_scr,
                  *, T, B):
    """Whole forward pass in one invocation (everything fits in VMEM).

    x_ref      : (T*B, I)     input sequences, time-major / batch-minor
    w_ih_e_ref : (I, 4H)      encoder LSTM input weights (T), g-cols pre-scaled 2x
    w_hh_e_ref : (H, 4H)      encoder LSTM recurrent weights (T), g-cols 2x
    b_e_ref    : (1, 4H)      encoder LSTM combined bias (b_ih+b_hh), g-cols 2x
    w_comb_ref : (T*H, 4H)    fused  w_emb_T @ w_ih_dec_T, g-cols 2x
    b_comb_ref : (1, 4H)      fused  b_emb @ w_ih_dec_T + b_dec, g-cols 2x
    w_hh_d_ref : (H, 4H)      decoder LSTM recurrent weights (T), g-cols 2x
    w_exp_ref  : (T*H, OP)    decoder_expand weight (T), lane-padded
    b_exp_ref  : (1, OP)      decoder_expand bias, lane-padded
    out_ref    : (B, OP)      flat decoded output per sequence (lane-padded)
    h_enc_scr  : (B, T*H)     VMEM scratch: relu(encoder h_t) at lane offset t*H
    h_dec_scr  : (B, T*H)     VMEM scratch: relu(decoder h_t) at lane offset t*H
    """
    H = w_hh_e_ref.shape[0]

    # ---------------- Encoder LSTM ----------------
    # Input contribution for every time step at once, bias folded in (hoisted
    # off the serial recurrence).
    xW = jnp.dot(x_ref[...], w_ih_e_ref[...],
                 preferred_element_type=jnp.float32) + b_e_ref[...]    # (T*B, 4H)
    w_hh_e = w_hh_e_ref[...]                                           # (H, 4H)

    h = jnp.zeros((B, H), jnp.float32)
    c = jnp.zeros((B, H), jnp.float32)
    for t in range(T):  # T = 7, fully unrolled at trace time
        gates = xW[t * B:(t + 1) * B, :] + jnp.dot(
            h, w_hh_e, preferred_element_type=jnp.float32)             # (B, 4H)
        sg = jax.nn.sigmoid(gates)          # single full-width EUP pass
        tg = 2.0 * sg[:, 2 * H:3 * H] - 1.0  # tanh(g) = 2*sigmoid(2g) - 1 (g pre-scaled)
        c = sg[:, H:2 * H] * c + sg[:, 0:H] * tg
        h = sg[:, 3 * H:4 * H] * jnp.tanh(c)
        # Stash relu(h_t) at lane offset t*H; the stores ride idle vst/XLU
        # slots and keep the projections off the recurrence's MXU chain.
        h_enc_scr[:, t * H:(t + 1) * H] = jnp.maximum(h, 0.0)

    # ---------------- Encoder->decoder handoff (fused) ----------------
    # gd = relu(encseq flat) @ (W_emb^T @ W_ih_dec^T) + (b_emb @ W_ih_dec^T + b_dec)
    # One (B, T*H) @ (T*H, 4H) matmul; loop-invariant for the whole decoder.
    gd = jnp.dot(h_enc_scr[...], w_comb_ref[...],
                 preferred_element_type=jnp.float32) + b_comb_ref[...]  # (B, 4H)

    # ---------------- Decoder LSTM ----------------
    w_hh_d = w_hh_d_ref[...]
    hd = jnp.zeros((B, H), jnp.float32)
    cd = jnp.zeros((B, H), jnp.float32)
    for t in range(T):
        gates = gd + jnp.dot(hd, w_hh_d, preferred_element_type=jnp.float32)
        sg = jax.nn.sigmoid(gates)
        tg = 2.0 * sg[:, 2 * H:3 * H] - 1.0
        cd = sg[:, H:2 * H] * cd + sg[:, 0:H] * tg
        hd = sg[:, 3 * H:4 * H] * jnp.tanh(cd)
        h_dec_scr[:, t * H:(t + 1) * H] = jnp.maximum(hd, 0.0)

    # decoder_expand(relu(decseq.view(-1))): single K=T*H matmul, lane-dense out.
    out_ref[...] = jnp.dot(h_dec_scr[...], w_exp_ref[...],
                           preferred_element_type=jnp.float32) + b_exp_ref[...]


def sequence_encoder_forward(x, kp):
    """x: (T, B, I) float32 — B independent sequences, each processed exactly
    like one PyTorch forward() call (seq_len=T, batch=1 semantics per column).

    kp: kernel-ready params from prepare_kernel_params (composition / scaling /
    padding already done once, outside the per-call path).

    Returns (decoded, mu, logvar); decoded has shape (T, B, I);
    mu = logvar = None (vae_mode=False path).
    """
    T, B, I = x.shape
    assert T == MAX_SEQLEN
    H = kp["w_hh_e"].shape[0]
    O = kp["O"]
    TO = kp["TO"]
    OP = kp["w_exp"].shape[1]

    Bp = ((max(B, 1) + 7) // 8) * 8          # batch -> sublane multiple of 8

    xp = x.astype(jnp.float32)
    if Bp != B:
        xp = jnp.concatenate(
            [xp, jnp.zeros((T, Bp - B, I), jnp.float32)], axis=1)
    x2d = xp.reshape(T * Bp, I)              # time-major, batch-minor rows

    inputs = (
        x2d,            # (T*Bp, I)
        kp["w_ih_e"],   # (I, 4H)
        kp["w_hh_e"],   # (H, 4H)
        kp["b_e"],      # (1, 4H)
        kp["w_comb"],   # (T*H, 4H)
        kp["b_comb"],   # (1, 4H)
        kp["w_hh_d"],   # (H, 4H)
        kp["w_exp"],    # (T*H, OP)
        kp["b_exp"],    # (1, OP)
    )

    kernel = functools.partial(seqenc_kernel, T=T, B=Bp)

    # Advisory cost hint for the XLA scheduler.
    flops = 2 * (T * Bp * I * 4 * H            # xW precompute
                 + 2 * T * Bp * H * 4 * H      # enc + dec recurrent matmuls
                 + Bp * (T * H) * 4 * H        # fused handoff
                 + Bp * (T * H) * OP)          # expand
    transcendentals = 2 * T * Bp * (4 * H + H)  # sigmoid(gates) + tanh(c) per step
    bytes_accessed = 4 * (sum(int(a.size) for a in inputs) + Bp * OP)
    ce = pl.CostEstimate(flops=flops, transcendentals=transcendentals,
                         bytes_accessed=bytes_accessed)

    # Grid-less call: everything is tiny, resident whole in VMEM — no 1-step
    # pipelining prologue/epilogue, no per-array block bookkeeping.
    out_pad = pl.pallas_call(
        kernel,
        out_shape=jax.ShapeDtypeStruct((Bp, OP), jnp.float32),
        in_specs=[pl.BlockSpec(memory_space=pltpu.MemorySpace.VMEM)
                  for _ in inputs],
        out_specs=pl.BlockSpec(memory_space=pltpu.MemorySpace.VMEM),
        scratch_shapes=[pltpu.VMEM((Bp, T * H), jnp.float32),
                        pltpu.VMEM((Bp, T * H), jnp.float32)],
        cost_estimate=ce,
    )(*inputs)

    out = out_pad[:B, :TO]                             # (B, T*O)
    decoded = out.reshape(B, T, O).transpose(1, 0, 2)  # (T, B, O)
    return decoded, None, None


def init_params(key, input_dim, hidden_dim, max_seqlen=MAX_SEQLEN):
    """Deterministic synthetic init mirroring the PyTorch module's shapes.

    LSTM params ~ U(-1/sqrt(H), 1/sqrt(H)); Linear weights xavier-normal,
    Linear biases ~ U(-1/sqrt(fan_in), 1/sqrt(fan_in)).  These are the 'raw'
    module params (used by the pure-JAX reference).
    """
    I, H, T, O = input_dim, hidden_dim, max_seqlen, input_dim
    ks = jax.random.split(key, 14)
    s = 1.0 / jnp.sqrt(jnp.float32(H))

    def u(k, shape, scale):
        return jax.random.uniform(k, shape, jnp.float32, -scale, scale)

    def xavier(k, shape):  # shape = (out, in)
        std = jnp.sqrt(2.0 / (shape[0] + shape[1]))
        return std * jax.random.normal(k, shape, jnp.float32)

    # Encoder LSTM (gate order i, f, g, o as in PyTorch)
    w_ih_e = u(ks[0], (4 * H, I), s)
    w_hh_e = u(ks[1], (4 * H, H), s)
    b_ih_e = u(ks[2], (4 * H,), s)
    b_hh_e = u(ks[3], (4 * H,), s)
    # encoder_embed: Linear(H*T -> H)
    w_emb = xavier(ks[4], (H, T * H))
    b_emb = u(ks[5], (H,), 1.0 / jnp.sqrt(jnp.float32(T * H)))
    # Decoder LSTM
    w_ih_d = u(ks[6], (4 * H, H), s)
    w_hh_d = u(ks[7], (4 * H, H), s)
    b_ih_d = u(ks[8], (4 * H,), s)
    b_hh_d = u(ks[9], (4 * H,), s)
    # decoder_expand: Linear(H*T -> O*T)
    w_exp = xavier(ks[10], (O * T, H * T))
    b_exp = u(ks[11], (O * T,), 1.0 / jnp.sqrt(jnp.float32(T * H)))

    return dict(
        w_ih_enc_T=w_ih_e.T, w_hh_enc_T=w_hh_e.T,
        b_enc=(b_ih_e + b_hh_e)[None, :],
        w_emb_T=w_emb.T, b_emb=b_emb[None, :],
        w_ih_dec_T=w_ih_d.T, w_hh_dec_T=w_hh_d.T,
        b_dec=(b_ih_d + b_hh_d)[None, :],
        w_exp_T=w_exp.T, b_exp=b_exp[None, :],
    )


def prepare_kernel_params(params, max_seqlen=MAX_SEQLEN, lane=128):
    """One-time (hoisted) kernel-side param prep:
      * fold a 2x scale into the g-gate (3rd quadrant) weight/bias columns so
        tanh(g) can be recovered as 2*sigmoid(2g)-1 inside the kernel,
      * fuse encoder_embed into the decoder input projection
        (W_comb = w_emb_T @ w_ih_dec_T, b_comb = b_emb @ w_ih_dec_T + b_dec),
      * lane-pad decoder_expand weight/bias so the kernel's output store is
        lane-dense (unmasked vst).
    """
    T = max_seqlen
    H = params["w_hh_enc_T"].shape[0]
    TO = params["w_exp_T"].shape[1]          # T * O
    O = TO // T

    def scale_g(w):                          # 2x on g-gate columns [2H, 3H)
        return w.at[:, 2 * H:3 * H].multiply(2.0)

    w_ih_e = scale_g(params["w_ih_enc_T"])
    w_hh_e = scale_g(params["w_hh_enc_T"])
    b_e = scale_g(params["b_enc"])

    w_comb = params["w_emb_T"] @ params["w_ih_dec_T"]                    # (T*H, 4H)
    b_comb = params["b_emb"] @ params["w_ih_dec_T"] + params["b_dec"]    # (1, 4H)
    w_comb = scale_g(w_comb)
    b_comb = scale_g(b_comb)
    w_hh_d = scale_g(params["w_hh_dec_T"])

    OP = ((TO + lane - 1) // lane) * lane
    w_exp = params["w_exp_T"]
    b_exp = params["b_exp"]
    if OP != TO:                             # lane-pad once, here (not per call)
        w_exp = jnp.pad(w_exp, ((0, 0), (0, OP - TO)))
        b_exp = jnp.pad(b_exp, ((0, 0), (0, OP - TO)))

    return dict(w_ih_e=w_ih_e, w_hh_e=w_hh_e, b_e=b_e,
                w_comb=w_comb, b_comb=b_comb, w_hh_d=w_hh_d,
                w_exp=w_exp, b_exp=b_exp,
                T=T, H=H, O=O, TO=TO)


def reference_forward(x, params):
    """Pure-JAX reference of the PyTorch forward (vae_mode=False), applied
    independently to each of the B sequences (as do_predict would)."""
    T, B, I = x.shape
    H = params["w_hh_enc_T"].shape[0]

    def run_lstm(seq, w_ih_T, w_hh_T, b):
        h = jnp.zeros((1, H), jnp.float32)
        c = jnp.zeros((1, H), jnp.float32)
        outs = []
        for t in range(seq.shape[0]):
            gates = seq[t:t + 1] @ w_ih_T + h @ w_hh_T + b
            i = jax.nn.sigmoid(gates[:, :H])
            f = jax.nn.sigmoid(gates[:, H:2 * H])
            g = jnp.tanh(gates[:, 2 * H:3 * H])
            o = jax.nn.sigmoid(gates[:, 3 * H:])
            c = f * c + i * g
            h = o * jnp.tanh(c)
            outs.append(h)
        return jnp.concatenate(outs, axis=0)  # (T, H)

    cols = []
    for b in range(B):
        enc = run_lstm(x[:, b, :], params["w_ih_enc_T"],
                       params["w_hh_enc_T"], params["b_enc"])
        embed = (jnp.maximum(enc, 0.0).reshape(1, -1) @ params["w_emb_T"]
                 + params["b_emb"])                                  # (1, H)
        dec_in = jnp.broadcast_to(embed, (T, H))
        dec = run_lstm(dec_in, params["w_ih_dec_T"],
                       params["w_hh_dec_T"], params["b_dec"])
        out = (jnp.maximum(dec, 0.0).reshape(1, -1) @ params["w_exp_T"]
               + params["b_exp"])                                    # (1, T*I)
        cols.append(out.reshape(T, 1, I))
    return jnp.concatenate(cols, axis=1)


if __name__ == "__main__":
    input_dim = 16
    hidden_dim = 32
    batch = 8  # 8 independent sequences (== 8 module.forward calls); fills the
               # 8-sublane batch block exactly.

    key = jax.random.PRNGKey(0)
    k_x, k_p = jax.random.split(key)
    x = jax.random.normal(k_x, (MAX_SEQLEN, batch, input_dim), jnp.float32)
    params = init_params(k_p, input_dim, hidden_dim)
    kparams = prepare_kernel_params(params)   # hoisted, once per model

    decoded, mu, logvar = sequence_encoder_forward(x, kparams)
    decoded = jax.block_until_ready(decoded)

    ref = reference_forward(x, params)
    assert decoded.shape == (MAX_SEQLEN, batch, input_dim)
    assert mu is None and logvar is None
    assert jnp.allclose(decoded, ref, atol=1e-4, rtol=1e-4), "mismatch vs reference"

    print("KERNEL_OK")
</pallas_src>

<mosaic_0001>
module attributes {stable_mosaic.version = 11 : i64} {
  func.func @seqenc_kernel(%arg0: memref<56x16xf32, #tpu.memory_space<vmem>>, %arg1: memref<16x128xf32, #tpu.memory_space<vmem>>, %arg2: memref<32x128xf32, #tpu.memory_space<vmem>>, %arg3: memref<1x128xf32, #tpu.memory_space<vmem>>, %arg4: memref<224x128xf32, #tpu.memory_space<vmem>>, %arg5: memref<1x128xf32, #tpu.memory_space<vmem>>, %arg6: memref<32x128xf32, #tpu.memory_space<vmem>>, %arg7: memref<224x128xf32, #tpu.memory_space<vmem>>, %arg8: memref<1x128xf32, #tpu.memory_space<vmem>>, %arg9: memref<8x128xf32, #tpu.memory_space<vmem>>, %arg10: memref<8x224xf32, #tpu.memory_space<vmem>>, %arg11: memref<8x224xf32, #tpu.memory_space<vmem>>) attributes {dimension_semantics = [], scalar_prefetch = 0 : i64, scratch_operands = 2 : i64, tpu.core_type = #tpu.core_type<tc>} {
    %c0 = arith.constant 0 : index
    %c0_0 = arith.constant 0 : index
    %0 = vector.load %arg0[%c0, %c0_0] : memref<56x16xf32, #tpu.memory_space<vmem>>, vector<56x16xf32>
    %c0_1 = arith.constant 0 : index
    %c0_2 = arith.constant 0 : index
    %1 = vector.load %arg1[%c0_1, %c0_2] : memref<16x128xf32, #tpu.memory_space<vmem>>, vector<16x128xf32>
    %cst = arith.constant dense<0.000000e+00> : vector<56x128xf32>
    %2 = tpu.matmul %0, %1, %cst {dimension_numbers = #tpu.dot_dimension_numbers<[1], [0], [0], [1], [0, 0, 1, 1], [], []>} : vector<56x16xf32>, vector<16x128xf32>, vector<56x128xf32> -> vector<56x128xf32>
    %c0_3 = arith.constant 0 : index
    %c0_4 = arith.constant 0 : index
    %3 = vector.load %arg3[%c0_3, %c0_4] : memref<1x128xf32, #tpu.memory_space<vmem>>, vector<1x128xf32>
    %4 = vector.broadcast %3 : vector<1x128xf32> to vector<56x128xf32>
    %5 = arith.addf %2, %4 : vector<56x128xf32>
    %c0_5 = arith.constant 0 : index
    %c0_6 = arith.constant 0 : index
    %6 = vector.load %arg2[%c0_5, %c0_6] : memref<32x128xf32, #tpu.memory_space<vmem>>, vector<32x128xf32>
    %cst_7 = arith.constant 0.000000e+00 : f32
    %7 = vector.broadcast %cst_7 : f32 to vector<8x32xf32>
    %cst_8 = arith.constant 0.000000e+00 : f32
    %8 = vector.broadcast %cst_8 : f32 to vector<8x32xf32>
    %9 = vector.extract_strided_slice %5 {offsets = [0, 0], sizes = [8, 128], strides = [1, 1]} : vector<56x128xf32> to vector<8x128xf32>
    %cst_9 = arith.constant dense<0.000000e+00> : vector<8x128xf32>
    %10 = tpu.matmul %7, %6, %cst_9 {dimension_numbers = #tpu.dot_dimension_numbers<[1], [0], [0], [1], [0, 0, 1, 1], [], []>} : vector<8x32xf32>, vector<32x128xf32>, vector<8x128xf32> -> vector<8x128xf32>
    %11 = arith.addf %9, %10 : vector<8x128xf32>
    %12 = arith.negf %11 : vector<8x128xf32>
    %13 = math.exp %12 : vector<8x128xf32>
    %cst_10 = arith.constant 1.000000e+00 : f32
    %14 = vector.broadcast %cst_10 : f32 to vector<8x128xf32>
    %15 = arith.addf %14, %13 : vector<8x128xf32>
    %16 = arith.divf %14, %15 : vector<8x128xf32>
    %17 = vector.extract_strided_slice %16 {offsets = [0, 64], sizes = [8, 32], strides = [1, 1]} : vector<8x128xf32> to vector<8x32xf32>
    %cst_11 = arith.constant 2.000000e+00 : f32
    %18 = vector.broadcast %cst_11 : f32 to vector<8x32xf32>
    %19 = arith.mulf %18, %17 : vector<8x32xf32>
    %cst_12 = arith.constant 1.000000e+00 : f32
    %20 = vector.broadcast %cst_12 : f32 to vector<8x32xf32>
    %21 = arith.subf %19, %20 : vector<8x32xf32>
    %22 = vector.extract_strided_slice %16 {offsets = [0, 32], sizes = [8, 32], strides = [1, 1]} : vector<8x128xf32> to vector<8x32xf32>
    %23 = arith.mulf %22, %8 : vector<8x32xf32>
    %24 = vector.extract_strided_slice %16 {offsets = [0, 0], sizes = [8, 32], strides = [1, 1]} : vector<8x128xf32> to vector<8x32xf32>
    %25 = arith.mulf %24, %21 : vector<8x32xf32>
    %26 = arith.addf %23, %25 : vector<8x32xf32>
    %27 = vector.extract_strided_slice %16 {offsets = [0, 96], sizes = [8, 32], strides = [1, 1]} : vector<8x128xf32> to vector<8x32xf32>
    %28 = math.tanh %26 : vector<8x32xf32>
    %29 = arith.mulf %27, %28 : vector<8x32xf32>
    %cst_13 = arith.constant 0.000000e+00 : f32
    %30 = vector.broadcast %cst_13 : f32 to vector<8x32xf32>
    %31 = arith.maximumf %29, %30 : vector<8x32xf32>
    %c0_14 = arith.constant 0 : index
    %c0_15 = arith.constant 0 : index
    %32 = vector.load %arg10[%c0_14, %c0_15] : memref<8x224xf32, #tpu.memory_space<vmem>>, vector<8x32xf32>
    tpu.vector_store %arg10[%c0_14, %c0_15], %31 {strides = array<i32>} : memref<8x224xf32, #tpu.memory_space<vmem>>, vector<8x32xf32>,
    %33 = vector.extract_strided_slice %5 {offsets = [8, 0], sizes = [8, 128], strides = [1, 1]} : vector<56x128xf32> to vector<8x128xf32>
    %cst_16 = arith.constant dense<0.000000e+00> : vector<8x128xf32>
    %34 = tpu.matmul %29, %6, %cst_16 {dimension_numbers = #tpu.dot_dimension_numbers<[1], [0], [0], [1], [0, 0, 1, 1], [], []>} : vector<8x32xf32>, vector<32x128xf32>, vector<8x128xf32> -> vector<8x128xf32>
    %35 = arith.addf %33, %34 : vector<8x128xf32>
    %36 = arith.negf %35 : vector<8x128xf32>
    %37 = math.exp %36 : vector<8x128xf32>
    %cst_17 = arith.constant 1.000000e+00 : f32
    %38 = vector.broadcast %cst_17 : f32 to vector<8x128xf32>
    %39 = arith.addf %38, %37 : vector<8x128xf32>
    %40 = arith.divf %38, %39 : vector<8x128xf32>
    %41 = vector.extract_strided_slice %40 {offsets = [0, 64], sizes = [8, 32], strides = [1, 1]} : vector<8x128xf32> to vector<8x32xf32>
    %cst_18 = arith.constant 2.000000e+00 : f32
    %42 = vector.broadcast %cst_18 : f32 to vector<8x32xf32>
    %43 = arith.mulf %42, %41 : vector<8x32xf32>
    %cst_19 = arith.constant 1.000000e+00 : f32
    %44 = vector.broadcast %cst_19 : f32 to vector<8x32xf32>
    %45 = arith.subf %43, %44 : vector<8x32xf32>
    %46 = vector.extract_strided_slice %40 {offsets = [0, 32], sizes = [8, 32], strides = [1, 1]} : vector<8x128xf32> to vector<8x32xf32>
    %47 = arith.mulf %46, %26 : vector<8x32xf32>
    %48 = vector.extract_strided_slice %40 {offsets = [0, 0], sizes = [8, 32], strides = [1, 1]} : vector<8x128xf32> to vector<8x32xf32>
    %49 = arith.mulf %48, %45 : vector<8x32xf32>
    %50 = arith.addf %47, %49 : vector<8x32xf32>
    %51 = vector.extract_strided_slice %40 {offsets = [0, 96], sizes = [8, 32], strides = [1, 1]} : vector<8x128xf32> to vector<8x32xf32>
    %52 = math.tanh %50 : vector<8x32xf32>
    %53 = arith.mulf %51, %52 : vector<8x32xf32>
    %cst_20 = arith.constant 0.000000e+00 : f32
    %54 = vector.broadcast %cst_20 : f32 to vector<8x32xf32>
    %55 = arith.maximumf %53, %54 : vector<8x32xf32>
    %c0_21 = arith.constant 0 : index
    %c32 = arith.constant 32 : index
    %56 = vector.load %arg10[%c0_21, %c32] : memref<8x224xf32, #tpu.memory_space<vmem>>, vector<8x32xf32>
    tpu.vector_store %arg10[%c0_21, %c32], %55 {strides = array<i32>} : memref<8x224xf32, #tpu.memory_space<vmem>>, vector<8x32xf32>,
    %57 = vector.extract_strided_slice %5 {offsets = [16, 0], sizes = [8, 128], strides = [1, 1]} : vector<56x128xf32> to vector<8x128xf32>
    %cst_22 = arith.constant dense<0.000000e+00> : vector<8x128xf32>
    %58 = tpu.matmul %53, %6, %cst_22 {dimension_numbers = #tpu.dot_dimension_numbers<[1], [0], [0], [1], [0, 0, 1, 1], [], []>} : vector<8x32xf32>, vector<32x128xf32>, vector<8x128xf32> -> vector<8x128xf32>
    %59 = arith.addf %57, %58 : vector<8x128xf32>
    %60 = arith.negf %59 : vector<8x128xf32>
    %61 = math.exp %60 : vector<8x128xf32>
    %cst_23 = arith.constant 1.000000e+00 : f32
    %62 = vector.broadcast %cst_23 : f32 to vector<8x128xf32>
    %63 = arith.addf %62, %61 : vector<8x128xf32>
    %64 = arith.divf %62, %63 : vector<8x128xf32>
    %65 = vector.extract_strided_slice %64 {offsets = [0, 64], sizes = [8, 32], strides = [1, 1]} : vector<8x128xf32> to vector<8x32xf32>
    %cst_24 = arith.constant 2.000000e+00 : f32
    %66 = vector.broadcast %cst_24 : f32 to vector<8x32xf32>
    %67 = arith.mulf %66, %65 : vector<8x32xf32>
    %cst_25 = arith.constant 1.000000e+00 : f32
    %68 = vector.broadcast %cst_25 : f32 to vector<8x32xf32>
    %69 = arith.subf %67, %68 : vector<8x32xf32>
    %70 = vector.extract_strided_slice %64 {offsets = [0, 32], sizes = [8, 32], strides = [1, 1]} : vector<8x128xf32> to vector<8x32xf32>
    %71 = arith.mulf %70, %50 : vector<8x32xf32>
    %72 = vector.extract_strided_slice %64 {offsets = [0, 0], sizes = [8, 32], strides = [1, 1]} : vector<8x128xf32> to vector<8x32xf32>
    %73 = arith.mulf %72, %69 : vector<8x32xf32>
    %74 = arith.addf %71, %73 : vector<8x32xf32>
    %75 = vector.extract_strided_slice %64 {offsets = [0, 96], sizes = [8, 32], strides = [1, 1]} : vector<8x128xf32> to vector<8x32xf32>
    %76 = math.tanh %74 : vector<8x32xf32>
    %77 = arith.mulf %75, %76 : vector<8x32xf32>
    %cst_26 = arith.constant 0.000000e+00 : f32
    %78 = vector.broadcast %cst_26 : f32 to vector<8x32xf32>
    %79 = arith.maximumf %77, %78 : vector<8x32xf32>
    %c0_27 = arith.constant 0 : index
    %c64 = arith.constant 64 : index
    %80 = vector.load %arg10[%c0_27, %c64] : memref<8x224xf32, #tpu.memory_space<vmem>>, vector<8x32xf32>
    tpu.vector_store %arg10[%c0_27, %c64], %79 {strides = array<i32>} : memref<8x224xf32, #tpu.memory_space<vmem>>, vector<8x32xf32>,
    %81 = vector.extract_strided_slice %5 {offsets = [24, 0], sizes = [8, 128], strides = [1, 1]} : vector<56x128xf32> to vector<8x128xf32>
    %cst_28 = arith.constant dense<0.000000e+00> : vector<8x128xf32>
    %82 = tpu.matmul %77, %6, %cst_28 {dimension_numbers = #tpu.dot_dimension_numbers<[1], [0], [0], [1], [0, 0, 1, 1], [], []>} : vector<8x32xf32>, vector<32x128xf32>, vector<8x128xf32> -> vector<8x128xf32>
    %83 = arith.addf %81, %82 : vector<8x128xf32>
    %84 = arith.negf %83 : vector<8x128xf32>
    %85 = math.exp %84 : vector<8x128xf32>
    %cst_29 = arith.constant 1.000000e+00 : f32
    %86 = vector.broadcast %cst_29 : f32 to vector<8x128xf32>
    %87 = arith.addf %86, %85 : vector<8x128xf32>
    %88 = arith.divf %86, %87 : vector<8x128xf32>
    %89 = vector.extract_strided_slice %88 {offsets = [0, 64], sizes = [8, 32], strides = [1, 1]} : vector<8x128xf32> to vector<8x32xf32>
    %cst_30 = arith.constant 2.000000e+00 : f32
    %90 = vector.broadcast %cst_30 : f32 to vector<8x32xf32>
    %91 = arith.mulf %90, %89 : vector<8x32xf32>
    %cst_31 = arith.constant 1.000000e+00 : f32
    %92 = vector.broadcast %cst_31 : f32 to vector<8x32xf32>
    %93 = arith.subf %91, %92 : vector<8x32xf32>
    %94 = vector.extract_strided_slice %88 {offsets = [0, 32], sizes = [8, 32], strides = [1, 1]} : vector<8x128xf32> to vector<8x32xf32>
    %95 = arith.mulf %94, %74 : vector<8x32xf32>
    %96 = vector.extract_strided_slice %88 {offsets = [0, 0], sizes = [8, 32], strides = [1, 1]} : vector<8x128xf32> to vector<8x32xf32>
    %97 = arith.mulf %96, %93 : vector<8x32xf32>
    %98 = arith.addf %95, %97 : vector<8x32xf32>
    %99 = vector.extract_strided_slice %88 {offsets = [0, 96], sizes = [8, 32], strides = [1, 1]} : vector<8x128xf32> to vector<8x32xf32>
    %100 = math.tanh %98 : vector<8x32xf32>
    %101 = arith.mulf %99, %100 : vector<8x32xf32>
    %cst_32 = arith.constant 0.000000e+00 : f32
    %102 = vector.broadcast %cst_32 : f32 to vector<8x32xf32>
    %103 = arith.maximumf %101, %102 : vector<8x32xf32>
    %c0_33 = arith.constant 0 : index
    %c96 = arith.constant 96 : index
    %104 = vector.load %arg10[%c0_33, %c96] : memref<8x224xf32, #tpu.memory_space<vmem>>, vector<8x32xf32>
    tpu.vector_store %arg10[%c0_33, %c96], %103 {strides = array<i32>} : memref<8x224xf32, #tpu.memory_space<vmem>>, vector<8x32xf32>,
    %105 = vector.extract_strided_slice %5 {offsets = [32, 0], sizes = [8, 128], strides = [1, 1]} : vector<56x128xf32> to vector<8x128xf32>
    %cst_34 = arith.constant dense<0.000000e+00> : vector<8x128xf32>
    %106 = tpu.matmul %101, %6, %cst_34 {dimension_numbers = #tpu.dot_dimension_numbers<[1], [0], [0], [1], [0, 0, 1, 1], [], []>} : vector<8x32xf32>, vector<32x128xf32>, vector<8x128xf32> -> vector<8x128xf32>
    %107 = arith.addf %105, %106 : vector<8x128xf32>
    %108 = arith.negf %107 : vector<8x128xf32>
    %109 = math.exp %108 : vector<8x128xf32>
    %cst_35 = arith.constant 1.000000e+00 : f32
    %110 = vector.broadcast %cst_35 : f32 to vector<8x128xf32>
    %111 = arith.addf %110, %109 : vector<8x128xf32>
    %112 = arith.divf %110, %111 : vector<8x128xf32>
    %113 = vector.extract_strided_slice %112 {offsets = [0, 64], sizes = [8, 32], strides = [1, 1]} : vector<8x128xf32> to vector<8x32xf32>
    %cst_36 = arith.constant 2.000000e+00 : f32
    %114 = vector.broadcast %cst_36 : f32 to vector<8x32xf32>
    %115 = arith.mulf %114, %113 : vector<8x32xf32>
    %cst_37 = arith.constant 1.000000e+00 : f32
    %116 = vector.broadcast %cst_37 : f32 to vector<8x32xf32>
    %117 = arith.subf %115, %116 : vector<8x32xf32>
    %118 = vector.extract_strided_slice %112 {offsets = [0, 32], sizes = [8, 32], strides = [1, 1]} : vector<8x128xf32> to vector<8x32xf32>
    %119 = arith.mulf %118, %98 : vector<8x32xf32>
    %120 = vector.extract_strided_slice %112 {offsets = [0, 0], sizes = [8, 32], strides = [1, 1]} : vector<8x128xf32> to vector<8x32xf32>
    %121 = arith.mulf %120, %117 : vector<8x32xf32>
    %122 = arith.addf %119, %121 : vector<8x32xf32>
    %123 = vector.extract_strided_slice %112 {offsets = [0, 96], sizes = [8, 32], strides = [1, 1]} : vector<8x128xf32> to vector<8x32xf32>
    %124 = math.tanh %122 : vector<8x32xf32>
    %125 = arith.mulf %123, %124 : vector<8x32xf32>
    %cst_38 = arith.constant 0.000000e+00 : f32
    %126 = vector.broadcast %cst_38 : f32 to vector<8x32xf32>
    %127 = arith.maximumf %125, %126 : vector<8x32xf32>
    %c0_39 = arith.constant 0 : index
    %c128 = arith.constant 128 : index
    %128 = vector.load %arg10[%c0_39, %c128] : memref<8x224xf32, #tpu.memory_space<vmem>>, vector<8x32xf32>
    tpu.vector_store %arg10[%c0_39, %c128], %127 {strides = array<i32>} : memref<8x224xf32, #tpu.memory_space<vmem>>, vector<8x32xf32>,
    %129 = vector.extract_strided_slice %5 {offsets = [40, 0], sizes = [8, 128], strides = [1, 1]} : vector<56x128xf32> to vector<8x128xf32>
    %cst_40 = arith.constant dense<0.000000e+00> : vector<8x128xf32>
    %130 = tpu.matmul %125, %6, %cst_40 {dimension_numbers = #tpu.dot_dimension_numbers<[1], [0], [0], [1], [0, 0, 1, 1], [], []>} : vector<8x32xf32>, vector<32x128xf32>, vector<8x128xf32> -> vector<8x128xf32>
    %131 = arith.addf %129, %130 : vector<8x128xf32>
    %132 = arith.negf %131 : vector<8x128xf32>
    %133 = math.exp %132 : vector<8x128xf32>
    %cst_41 = arith.constant 1.000000e+00 : f32
    %134 = vector.broadcast %cst_41 : f32 to vector<8x128xf32>
    %135 = arith.addf %134, %133 : vector<8x128xf32>
    %136 = arith.divf %134, %135 : vector<8x128xf32>
    %137 = vector.extract_strided_slice %136 {offsets = [0, 64], sizes = [8, 32], strides = [1, 1]} : vector<8x128xf32> to vector<8x32xf32>
    %cst_42 = arith.constant 2.000000e+00 : f32
    %138 = vector.broadcast %cst_42 : f32 to vector<8x32xf32>
    %139 = arith.mulf %138, %137 : vector<8x32xf32>
    %cst_43 = arith.constant 1.000000e+00 : f32
    %140 = vector.broadcast %cst_43 : f32 to vector<8x32xf32>
    %141 = arith.subf %139, %140 : vector<8x32xf32>
    %142 = vector.extract_strided_slice %136 {offsets = [0, 32], sizes = [8, 32], strides = [1, 1]} : vector<8x128xf32> to vector<8x32xf32>
    %143 = arith.mulf %142, %122 : vector<8x32xf32>
    %144 = vector.extract_strided_slice %136 {offsets = [0, 0], sizes = [8, 32], strides = [1, 1]} : vector<8x128xf32> to vector<8x32xf32>
    %145 = arith.mulf %144, %141 : vector<8x32xf32>
    %146 = arith.addf %143, %145 : vector<8x32xf32>
    %147 = vector.extract_strided_slice %136 {offsets = [0, 96], sizes = [8, 32], strides = [1, 1]} : vector<8x128xf32> to vector<8x32xf32>
    %148 = math.tanh %146 : vector<8x32xf32>
    %149 = arith.mulf %147, %148 : vector<8x32xf32>
    %cst_44 = arith.constant 0.000000e+00 : f32
    %150 = vector.broadcast %cst_44 : f32 to vector<8x32xf32>
    %151 = arith.maximumf %149, %150 : vector<8x32xf32>
    %c0_45 = arith.constant 0 : index
    %c160 = arith.constant 160 : index
    %152 = vector.load %arg10[%c0_45, %c160] : memref<8x224xf32, #tpu.memory_space<vmem>>, vector<8x32xf32>
    tpu.vector_store %arg10[%c0_45, %c160], %151 {strides = array<i32>} : memref<8x224xf32, #tpu.memory_space<vmem>>, vector<8x32xf32>,
    %153 = vector.extract_strided_slice %5 {offsets = [48, 0], sizes = [8, 128], strides = [1, 1]} : vector<56x128xf32> to vector<8x128xf32>
    %cst_46 = arith.constant dense<0.000000e+00> : vector<8x128xf32>
    %154 = tpu.matmul %149, %6, %cst_46 {dimension_numbers = #tpu.dot_dimension_numbers<[1], [0], [0], [1], [0, 0, 1, 1], [], []>} : vector<8x32xf32>, vector<32x128xf32>, vector<8x128xf32> -> vector<8x128xf32>
    %155 = arith.addf %153, %154 : vector<8x128xf32>
    %156 = arith.negf %155 : vector<8x128xf32>
    %157 = math.exp %156 : vector<8x128xf32>
    %cst_47 = arith.constant 1.000000e+00 : f32
    %158 = vector.broadcast %cst_47 : f32 to vector<8x128xf32>
    %159 = arith.addf %158, %157 : vector<8x128xf32>
    %160 = arith.divf %158, %159 : vector<8x128xf32>
    %161 = vector.extract_strided_slice %160 {offsets = [0, 64], sizes = [8, 32], strides = [1, 1]} : vector<8x128xf32> to vector<8x32xf32>
    %cst_48 = arith.constant 2.000000e+00 : f32
    %162 = vector.broadcast %cst_48 : f32 to vector<8x32xf32>
    %163 = arith.mulf %162, %161 : vector<8x32xf32>
    %cst_49 = arith.constant 1.000000e+00 : f32
    %164 = vector.broadcast %cst_49 : f32 to vector<8x32xf32>
    %165 = arith.subf %163, %164 : vector<8x32xf32>
    %166 = vector.extract_strided_slice %160 {offsets = [0, 32], sizes = [8, 32], strides = [1, 1]} : vector<8x128xf32> to vector<8x32xf32>
    %167 = arith.mulf %166, %146 : vector<8x32xf32>
    %168 = vector.extract_strided_slice %160 {offsets = [0, 0], sizes = [8, 32], strides = [1, 1]} : vector<8x128xf32> to vector<8x32xf32>
    %169 = arith.mulf %168, %165 : vector<8x32xf32>
    %170 = arith.addf %167, %169 : vector<8x32xf32>
    %171 = vector.extract_strided_slice %160 {offsets = [0, 96], sizes = [8, 32], strides = [1, 1]} : vector<8x128xf32> to vector<8x32xf32>
    %172 = math.tanh %170 : vector<8x32xf32>
    %173 = arith.mulf %171, %172 : vector<8x32xf32>
    %cst_50 = arith.constant 0.000000e+00 : f32
    %174 = vector.broadcast %cst_50 : f32 to vector<8x32xf32>
    %175 = arith.maximumf %173, %174 : vector<8x32xf32>
    %c0_51 = arith.constant 0 : index
    %c192 = arith.constant 192 : index
    %176 = vector.load %arg10[%c0_51, %c192] : memref<8x224xf32, #tpu.memory_space<vmem>>, vector<8x32xf32>
    tpu.vector_store %arg10[%c0_51, %c192], %175 {strides = array<i32>} : memref<8x224xf32, #tpu.memory_space<vmem>>, vector<8x32xf32>,
    %c0_52 = arith.constant 0 : index
    %c0_53 = arith.constant 0 : index
    %177 = vector.load %arg10[%c0_52, %c0_53] : memref<8x224xf32, #tpu.memory_space<vmem>>, vector<8x224xf32>
    %c0_54 = arith.constant 0 : index
    %c0_55 = arith.constant 0 : index
    %178 = vector.load %arg4[%c0_54, %c0_55] : memref<224x128xf32, #tpu.memory_space<vmem>>, vector<224x128xf32>
    %cst_56 = arith.constant dense<0.000000e+00> : vector<8x128xf32>
    %179 = tpu.matmul %177, %178, %cst_56 {dimension_numbers = #tpu.dot_dimension_numbers<[1], [0], [0], [1], [0, 0, 1, 1], [], []>} : vector<8x224xf32>, vector<224x128xf32>, vector<8x128xf32> -> vector<8x128xf32>
    %c0_57 = arith.constant 0 : index
    %c0_58 = arith.constant 0 : index
    %180 = vector.load %arg5[%c0_57, %c0_58] : memref<1x128xf32, #tpu.memory_space<vmem>>, vector<1x128xf32>
    %181 = vector.broadcast %180 : vector<1x128xf32> to vector<8x128xf32>
    %182 = arith.addf %179, %181 : vector<8x128xf32>
    %c0_59 = arith.constant 0 : index
    %c0_60 = arith.constant 0 : index
    %183 = vector.load %arg6[%c0_59, %c0_60] : memref<32x128xf32, #tpu.memory_space<vmem>>, vector<32x128xf32>
    %cst_61 = arith.constant 0.000000e+00 : f32
    %184 = vector.broadcast %cst_61 : f32 to vector<8x32xf32>
    %cst_62 = arith.constant 0.000000e+00 : f32
    %185 = vector.broadcast %cst_62 : f32 to vector<8x32xf32>
    %cst_63 = arith.constant dense<0.000000e+00> : vector<8x128xf32>
    %186 = tpu.matmul %184, %183, %cst_63 {dimension_numbers = #tpu.dot_dimension_numbers<[1], [0], [0], [1], [0, 0, 1, 1], [], []>} : vector<8x32xf32>, vector<32x128xf32>, vector<8x128xf32> -> vector<8x128xf32>
    %187 = arith.addf %182, %186 : vector<8x128xf32>
    %188 = arith.negf %187 : vector<8x128xf32>
    %189 = math.exp %188 : vector<8x128xf32>
    %cst_64 = arith.constant 1.000000e+00 : f32
    %190 = vector.broadcast %cst_64 : f32 to vector<8x128xf32>
    %191 = arith.addf %190, %189 : vector<8x128xf32>
    %192 = arith.divf %190, %191 : vector<8x128xf32>
    %193 = vector.extract_strided_slice %192 {offsets = [0, 64], sizes = [8, 32], strides = [1, 1]} : vector<8x128xf32> to vector<8x32xf32>
    %cst_65 = arith.constant 2.000000e+00 : f32
    %194 = vector.broadcast %cst_65 : f32 to vector<8x32xf32>
    %195 = arith.mulf %194, %193 : vector<8x32xf32>
    %cst_66 = arith.constant 1.000000e+00 : f32
    %196 = vector.broadcast %cst_66 : f32 to vector<8x32xf32>
    %197 = arith.subf %195, %196 : vector<8x32xf32>
    %198 = vector.extract_strided_slice %192 {offsets = [0, 32], sizes = [8, 32], strides = [1, 1]} : vector<8x128xf32> to vector<8x32xf32>
    %199 = arith.mulf %198, %185 : vector<8x32xf32>
    %200 = vector.extract_strided_slice %192 {offsets = [0, 0], sizes = [8, 32], strides = [1, 1]} : vector<8x128xf32> to vector<8x32xf32>
    %201 = arith.mulf %200, %197 : vector<8x32xf32>
    %202 = arith.addf %199, %201 : vector<8x32xf32>
    %203 = vector.extract_strided_slice %192 {offsets = [0, 96], sizes = [8, 32], strides = [1, 1]} : vector<8x128xf32> to vector<8x32xf32>
    %204 = math.tanh %202 : vector<8x32xf32>
    %205 = arith.mulf %203, %204 : vector<8x32xf32>
    %cst_67 = arith.constant 0.000000e+00 : f32
    %206 = vector.broadcast %cst_67 : f32 to vector<8x32xf32>
    %207 = arith.maximumf %205, %206 : vector<8x32xf32>
    %c0_68 = arith.constant 0 : index
    %c0_69 = arith.constant 0 : index
    %208 = vector.load %arg11[%c0_68, %c0_69] : memref<8x224xf32, #tpu.memory_space<vmem>>, vector<8x32xf32>
    tpu.vector_store %arg11[%c0_68, %c0_69], %207 {strides = array<i32>} : memref<8x224xf32, #tpu.memory_space<vmem>>, vector<8x32xf32>,
    %cst_70 = arith.constant dense<0.000000e+00> : vector<8x128xf32>
    %209 = tpu.matmul %205, %183, %cst_70 {dimension_numbers = #tpu.dot_dimension_numbers<[1], [0], [0], [1], [0, 0, 1, 1], [], []>} : vector<8x32xf32>, vector<32x128xf32>, vector<8x128xf32> -> vector<8x128xf32>
    %210 = arith.addf %182, %209 : vector<8x128xf32>
    %211 = arith.negf %210 : vector<8x128xf32>
    %212 = math.exp %211 : vector<8x128xf32>
    %cst_71 = arith.constant 1.000000e+00 : f32
    %213 = vector.broadcast %cst_71 : f32 to vector<8x128xf32>
    %214 = arith.addf %213, %212 : vector<8x128xf32>
    %215 = arith.divf %213, %214 : vector<8x128xf32>
    %216 = vector.extract_strided_slice %215 {offsets = [0, 64], sizes = [8, 32], strides = [1, 1]} : vector<8x128xf32> to vector<8x32xf32>
    %cst_72 = arith.constant 2.000000e+00 : f32
    %217 = vector.broadcast %cst_72 : f32 to vector<8x32xf32>
    %218 = arith.mulf %217, %216 : vector<8x32xf32>
    %cst_73 = arith.constant 1.000000e+00 : f32
    %219 = vector.broadcast %cst_73 : f32 to vector<8x32xf32>
    %220 = arith.subf %218, %219 : vector<8x32xf32>
    %221 = vector.extract_strided_slice %215 {offsets = [0, 32], sizes = [8, 32], strides = [1, 1]} : vector<8x128xf32> to vector<8x32xf32>
    %222 = arith.mulf %221, %202 : vector<8x32xf32>
    %223 = vector.extract_strided_slice %215 {offsets = [0, 0], sizes = [8, 32], strides = [1, 1]} : vector<8x128xf32> to vector<8x32xf32>
    %224 = arith.mulf %223, %220 : vector<8x32xf32>
    %225 = arith.addf %222, %224 : vector<8x32xf32>
    %226 = vector.extract_strided_slice %215 {offsets = [0, 96], sizes = [8, 32], strides = [1, 1]} : vector<8x128xf32> to vector<8x32xf32>
    %227 = math.tanh %225 : vector<8x32xf32>
    %228 = arith.mulf %226, %227 : vector<8x32xf32>
    %cst_74 = arith.constant 0.000000e+00 : f32
    %229 = vector.broadcast %cst_74 : f32 to vector<8x32xf32>
    %230 = arith.maximumf %228, %229 : vector<8x32xf32>
    %c0_75 = arith.constant 0 : index
    %c32_76 = arith.constant 32 : index
    %231 = vector.load %arg11[%c0_75, %c32_76] : memref<8x224xf32, #tpu.memory_space<vmem>>, vector<8x32xf32>
    tpu.vector_store %arg11[%c0_75, %c32_76], %230 {strides = array<i32>} : memref<8x224xf32, #tpu.memory_space<vmem>>, vector<8x32xf32>,
    %cst_77 = arith.constant dense<0.000000e+00> : vector<8x128xf32>
    %232 = tpu.matmul %228, %183, %cst_77 {dimension_numbers = #tpu.dot_dimension_numbers<[1], [0], [0], [1], [0, 0, 1, 1], [], []>} : vector<8x32xf32>, vector<32x128xf32>, vector<8x128xf32> -> vector<8x128xf32>
    %233 = arith.addf %182, %232 : vector<8x128xf32>
    %234 = arith.negf %233 : vector<8x128xf32>
    %235 = math.exp %234 : vector<8x128xf32>
    %cst_78 = arith.constant 1.000000e+00 : f32
    %236 = vector.broadcast %cst_78 : f32 to vector<8x128xf32>
    %237 = arith.addf %236, %235 : vector<8x128xf32>
    %238 = arith.divf %236, %237 : vector<8x128xf32>
    %239 = vector.extract_strided_slice %238 {offsets = [0, 64], sizes = [8, 32], strides = [1, 1]} : vector<8x128xf32> to vector<8x32xf32>
    %cst_79 = arith.constant 2.000000e+00 : f32
    %240 = vector.broadcast %cst_79 : f32 to vector<8x32xf32>
    %241 = arith.mulf %240, %239 : vector<8x32xf32>
    %cst_80 = arith.constant 1.000000e+00 : f32
    %242 = vector.broadcast %cst_80 : f32 to vector<8x32xf32>
    %243 = arith.subf %241, %242 : vector<8x32xf32>
    %244 = vector.extract_strided_slice %238 {offsets = [0, 32], sizes = [8, 32], strides = [1, 1]} : vector<8x128xf32> to vector<8x32xf32>
    %245 = arith.mulf %244, %225 : vector<8x32xf32>
    %246 = vector.extract_strided_slice %238 {offsets = [0, 0], sizes = [8, 32], strides = [1, 1]} : vector<8x128xf32> to vector<8x32xf32>
    %247 = arith.mulf %246, %243 : vector<8x32xf32>
    %248 = arith.addf %245, %247 : vector<8x32xf32>
    %249 = vector.extract_strided_slice %238 {offsets = [0, 96], sizes = [8, 32], strides = [1, 1]} : vector<8x128xf32> to vector<8x32xf32>
    %250 = math.tanh %248 : vector<8x32xf32>
    %251 = arith.mulf %249, %250 : vector<8x32xf32>
    %cst_81 = arith.constant 0.000000e+00 : f32
    %252 = vector.broadcast %cst_81 : f32 to vector<8x32xf32>
    %253 = arith.maximumf %251, %252 : vector<8x32xf32>
    %c0_82 = arith.constant 0 : index
    %c64_83 = arith.constant 64 : index
    %254 = vector.load %arg11[%c0_82, %c64_83] : memref<8x224xf32, #tpu.memory_space<vmem>>, vector<8x32xf32>
    tpu.vector_store %arg11[%c0_82, %c64_83], %253 {strides = array<i32>} : memref<8x224xf32, #tpu.memory_space<vmem>>, vector<8x32xf32>,
    %cst_84 = arith.constant dense<0.000000e+00> : vector<8x128xf32>
    %255 = tpu.matmul %251, %183, %cst_84 {dimension_numbers = #tpu.dot_dimension_numbers<[1], [0], [0], [1], [0, 0, 1, 1], [], []>} : vector<8x32xf32>, vector<32x128xf32>, vector<8x128xf32> -> vector<8x128xf32>
    %256 = arith.addf %182, %255 : vector<8x128xf32>
    %257 = arith.negf %256 : vector<8x128xf32>
    %258 = math.exp %257 : vector<8x128xf32>
    %cst_85 = arith.constant 1.000000e+00 : f32
    %259 = vector.broadcast %cst_85 : f32 to vector<8x128xf32>
    %260 = arith.addf %259, %258 : vector<8x128xf32>
    %261 = arith.divf %259, %260 : vector<8x128xf32>
    %262 = vector.extract_strided_slice %261 {offsets = [0, 64], sizes = [8, 32], strides = [1, 1]} : vector<8x128xf32> to vector<8x32xf32>
    %cst_86 = arith.constant 2.000000e+00 : f32
    %263 = vector.broadcast %cst_86 : f32 to vector<8x32xf32>
    %264 = arith.mulf %263, %262 : vector<8x32xf32>
    %cst_87 = arith.constant 1.000000e+00 : f32
    %265 = vector.broadcast %cst_87 : f32 to vector<8x32xf32>
    %266 = arith.subf %264, %265 : vector<8x32xf32>
    %267 = vector.extract_strided_slice %261 {offsets = [0, 32], sizes = [8, 32], strides = [1, 1]} : vector<8x128xf32> to vector<8x32xf32>
    %268 = arith.mulf %267, %248 : vector<8x32xf32>
    %269 = vector.extract_strided_slice %261 {offsets = [0, 0], sizes = [8, 32], strides = [1, 1]} : vector<8x128xf32> to vector<8x32xf32>
    %270 = arith.mulf %269, %266 : vector<8x32xf32>
    %271 = arith.addf %268, %270 : vector<8x32xf32>
    %272 = vector.extract_strided_slice %261 {offsets = [0, 96], sizes = [8, 32], strides = [1, 1]} : vector<8x128xf32> to vector<8x32xf32>
    %273 = math.tanh %271 : vector<8x32xf32>
    %274 = arith.mulf %272, %273 : vector<8x32xf32>
    %cst_88 = arith.constant 0.000000e+00 : f32
    %275 = vector.broadcast %cst_88 : f32 to vector<8x32xf32>
    %276 = arith.maximumf %274, %275 : vector<8x32xf32>
    %c0_89 = arith.constant 0 : index
    %c96_90 = arith.constant 96 : index
    %277 = vector.load %arg11[%c0_89, %c96_90] : memref<8x224xf32, #tpu.memory_space<vmem>>, vector<8x32xf32>
    tpu.vector_store %arg11[%c0_89, %c96_90], %276 {strides = array<i32>} : memref<8x224xf32, #tpu.memory_space<vmem>>, vector<8x32xf32>,
    %cst_91 = arith.constant dense<0.000000e+00> : vector<8x128xf32>
    %278 = tpu.matmul %274, %183, %cst_91 {dimension_numbers = #tpu.dot_dimension_numbers<[1], [0], [0], [1], [0, 0, 1, 1], [], []>} : vector<8x32xf32>, vector<32x128xf32>, vector<8x128xf32> -> vector<8x128xf32>
    %279 = arith.addf %182, %278 : vector<8x128xf32>
    %280 = arith.negf %279 : vector<8x128xf32>
    %281 = math.exp %280 : vector<8x128xf32>
    %cst_92 = arith.constant 1.000000e+00 : f32
    %282 = vector.broadcast %cst_92 : f32 to vector<8x128xf32>
    %283 = arith.addf %282, %281 : vector<8x128xf32>
    %284 = arith.divf %282, %283 : vector<8x128xf32>
    %285 = vector.extract_strided_slice %284 {offsets = [0, 64], sizes = [8, 32], strides = [1, 1]} : vector<8x128xf32> to vector<8x32xf32>
    %cst_93 = arith.constant 2.000000e+00 : f32
    %286 = vector.broadcast %cst_93 : f32 to vector<8x32xf32>
    %287 = arith.mulf %286, %285 : vector<8x32xf32>
    %cst_94 = arith.constant 1.000000e+00 : f32
    %288 = vector.broadcast %cst_94 : f32 to vector<8x32xf32>
    %289 = arith.subf %287, %288 : vector<8x32xf32>
    %290 = vector.extract_strided_slice %284 {offsets = [0, 32], sizes = [8, 32], strides = [1, 1]} : vector<8x128xf32> to vector<8x32xf32>
    %291 = arith.mulf %290, %271 : vector<8x32xf32>
    %292 = vector.extract_strided_slice %284 {offsets = [0, 0], sizes = [8, 32], strides = [1, 1]} : vector<8x128xf32> to vector<8x32xf32>
    %293 = arith.mulf %292, %289 : vector<8x32xf32>
    %294 = arith.addf %291, %293 : vector<8x32xf32>
    %295 = vector.extract_strided_slice %284 {offsets = [0, 96], sizes = [8, 32], strides = [1, 1]} : vector<8x128xf32> to vector<8x32xf32>
    %296 = math.tanh %294 : vector<8x32xf32>
    %297 = arith.mulf %295, %296 : vector<8x32xf32>
    %cst_95 = arith.constant 0.000000e+00 : f32
    %298 = vector.broadcast %cst_95 : f32 to vector<8x32xf32>
    %299 = arith.maximumf %297, %298 : vector<8x32xf32>
    %c0_96 = arith.constant 0 : index
    %c128_97 = arith.constant 128 : index
    %300 = vector.load %arg11[%c0_96, %c128_97] : memref<8x224xf32, #tpu.memory_space<vmem>>, vector<8x32xf32>
    tpu.vector_store %arg11[%c0_96, %c128_97], %299 {strides = array<i32>} : memref<8x224xf32, #tpu.memory_space<vmem>>, vector<8x32xf32>,
    %cst_98 = arith.constant dense<0.000000e+00> : vector<8x128xf32>
    %301 = tpu.matmul %297, %183, %cst_98 {dimension_numbers = #tpu.dot_dimension_numbers<[1], [0], [0], [1], [0, 0, 1, 1], [], []>} : vector<8x32xf32>, vector<32x128xf32>, vector<8x128xf32> -> vector<8x128xf32>
    %302 = arith.addf %182, %301 : vector<8x128xf32>
    %303 = arith.negf %302 : vector<8x128xf32>
    %304 = math.exp %303 : vector<8x128xf32>
    %cst_99 = arith.constant 1.000000e+00 : f32
    %305 = vector.broadcast %cst_99 : f32 to vector<8x128xf32>
    %306 = arith.addf %305, %304 : vector<8x128xf32>
    %307 = arith.divf %305, %306 : vector<8x128xf32>
    %308 = vector.extract_strided_slice %307 {offsets = [0, 64], sizes = [8, 32], strides = [1, 1]} : vector<8x128xf32> to vector<8x32xf32>
    %cst_100 = arith.constant 2.000000e+00 : f32
    %309 = vector.broadcast %cst_100 : f32 to vector<8x32xf32>
    %310 = arith.mulf %309, %308 : vector<8x32xf32>
    %cst_101 = arith.constant 1.000000e+00 : f32
    %311 = vector.broadcast %cst_101 : f32 to vector<8x32xf32>
    %312 = arith.subf %310, %311 : vector<8x32xf32>
    %313 = vector.extract_strided_slice %307 {offsets = [0, 32], sizes = [8, 32], strides = [1, 1]} : vector<8x128xf32> to vector<8x32xf32>
    %314 = arith.mulf %313, %294 : vector<8x32xf32>
    %315 = vector.extract_strided_slice %307 {offsets = [0, 0], sizes = [8, 32], strides = [1, 1]} : vector<8x128xf32> to vector<8x32xf32>
    %316 = arith.mulf %315, %312 : vector<8x32xf32>
    %317 = arith.addf %314, %316 : vector<8x32xf32>
    %318 = vector.extract_strided_slice %307 {offsets = [0, 96], sizes = [8, 32], strides = [1, 1]} : vector<8x128xf32> to vector<8x32xf32>
    %319 = math.tanh %317 : vector<8x32xf32>
    %320 = arith.mulf %318, %319 : vector<8x32xf32>
    %cst_102 = arith.constant 0.000000e+00 : f32
    %321 = vector.broadcast %cst_102 : f32 to vector<8x32xf32>
    %322 = arith.maximumf %320, %321 : vector<8x32xf32>
    %c0_103 = arith.constant 0 : index
    %c160_104 = arith.constant 160 : index
    %323 = vector.load %arg11[%c0_103, %c160_104] : memref<8x224xf32, #tpu.memory_space<vmem>>, vector<8x32xf32>
    tpu.vector_store %arg11[%c0_103, %c160_104], %322 {strides = array<i32>} : memref<8x224xf32, #tpu.memory_space<vmem>>, vector<8x32xf32>,
    %cst_105 = arith.constant dense<0.000000e+00> : vector<8x128xf32>
    %324 = tpu.matmul %320, %183, %cst_105 {dimension_numbers = #tpu.dot_dimension_numbers<[1], [0], [0], [1], [0, 0, 1, 1], [], []>} : vector<8x32xf32>, vector<32x128xf32>, vector<8x128xf32> -> vector<8x128xf32>
    %325 = arith.addf %182, %324 : vector<8x128xf32>
    %326 = arith.negf %325 : vector<8x128xf32>
    %327 = math.exp %326 : vector<8x128xf32>
    %cst_106 = arith.constant 1.000000e+00 : f32
    %328 = vector.broadcast %cst_106 : f32 to vector<8x128xf32>
    %329 = arith.addf %328, %327 : vector<8x128xf32>
    %330 = arith.divf %328, %329 : vector<8x128xf32>
    %331 = vector.extract_strided_slice %330 {offsets = [0, 64], sizes = [8, 32], strides = [1, 1]} : vector<8x128xf32> to vector<8x32xf32>
    %cst_107 = arith.constant 2.000000e+00 : f32
    %332 = vector.broadcast %cst_107 : f32 to vector<8x32xf32>
    %333 = arith.mulf %332, %331 : vector<8x32xf32>
    %cst_108 = arith.constant 1.000000e+00 : f32
    %334 = vector.broadcast %cst_108 : f32 to vector<8x32xf32>
    %335 = arith.subf %333, %334 : vector<8x32xf32>
    %336 = vector.extract_strided_slice %330 {offsets = [0, 32], sizes = [8, 32], strides = [1, 1]} : vector<8x128xf32> to vector<8x32xf32>
    %337 = arith.mulf %336, %317 : vector<8x32xf32>
    %338 = vector.extract_strided_slice %330 {offsets = [0, 0], sizes = [8, 32], strides = [1, 1]} : vector<8x128xf32> to vector<8x32xf32>
    %339 = arith.mulf %338, %335 : vector<8x32xf32>
    %340 = arith.addf %337, %339 : vector<8x32xf32>
    %341 = vector.extract_strided_slice %330 {offsets = [0, 96], sizes = [8, 32], strides = [1, 1]} : vector<8x128xf32> to vector<8x32xf32>
    %342 = math.tanh %340 : vector<8x32xf32>
    %343 = arith.mulf %341, %342 : vector<8x32xf32>
    %cst_109 = arith.constant 0.000000e+00 : f32
    %344 = vector.broadcast %cst_109 : f32 to vector<8x32xf32>
    %345 = arith.maximumf %343, %344 : vector<8x32xf32>
    %c0_110 = arith.constant 0 : index
    %c192_111 = arith.constant 192 : index
    %346 = vector.load %arg11[%c0_110, %c192_111] : memref<8x224xf32, #tpu.memory_space<vmem>>, vector<8x32xf32>
    tpu.vector_store %arg11[%c0_110, %c192_111], %345 {strides = array<i32>} : memref<8x224xf32, #tpu.memory_space<vmem>>, vector<8x32xf32>,
    %c0_112 = arith.constant 0 : index
    %c0_113 = arith.constant 0 : index
    %347 = vector.load %arg11[%c0_112, %c0_113] : memref<8x224xf32, #tpu.memory_space<vmem>>, vector<8x224xf32>
    %c0_114 = arith.constant 0 : index
    %c0_115 = arith.constant 0 : index
    %348 = vector.load %arg7[%c0_114, %c0_115] : memref<224x128xf32, #tpu.memory_space<vmem>>, vector<224x128xf32>
    %cst_116 = arith.constant dense<0.000000e+00> : vector<8x128xf32>
    %349 = tpu.matmul %347, %348, %cst_116 {dimension_numbers = #tpu.dot_dimension_numbers<[1], [0], [0], [1], [0, 0, 1, 1], [], []>} : vector<8x224xf32>, vector<224x128xf32>, vector<8x128xf32> -> vector<8x128xf32>
    %c0_117 = arith.constant 0 : index
    %c0_118 = arith.constant 0 : index
    %350 = vector.load %arg8[%c0_117, %c0_118] : memref<1x128xf32, #tpu.memory_space<vmem>>, vector<1x128xf32>
    %351 = vector.broadcast %350 : vector<1x128xf32> to vector<8x128xf32>
    %352 = arith.addf %349, %351 : vector<8x128xf32>
    %c0_119 = arith.constant 0 : index
    %c0_120 = arith.constant 0 : index
    %353 = vector.load %arg9[%c0_119, %c0_120] : memref<8x128xf32, #tpu.memory_space<vmem>>, vector<8x128xf32>
    tpu.vector_store %arg9[%c0_119, %c0_120], %352 {strides = array<i32>} : memref<8x128xf32, #tpu.memory_space<vmem>>, vector<8x128xf32>,
    return
  }
}

</mosaic_0001>

<llo_original>
// kernel: tpu_custom_call.1
$region0: #{tpu_custom_call.1}
  #allocation0 [shape = 'u32[]', space=smem, size = 0x4, offset = 0x4, fixed_abs, tag = 'smem constant byte address 0x4 - core index']
  #allocation1 [shape = 'u32[144,128]{1,0:T(1,128)}', space=vmem, size = 0x12000, scoped, tag = 'internal scratch']
  #allocation2 [shape = 'f32[8,224]{1,0:T(8,128)}', space=vmem, size = 0x2000, scoped, tag = 'scratch operand']
  #allocation3 [shape = 'f32[8,224]{1,0:T(8,128)}', space=vmem, size = 0x2000, scoped, tag = 'scratch operand']
  %s0 = inlined_call_operand.vmem [shape: f32[56,16], index: 0, kind: input, shape index: {}]
  %s1 = inlined_call_operand.hbm [shape: f32[16,128], index: 1, kind: input, shape index: {}]
  %s2 = inlined_call_operand.vmem [shape: f32[32,128], index: 2, kind: input, shape index: {}]
  %s3 = inlined_call_operand.vmem [shape: f32[1,128], index: 3, kind: input, shape index: {}]
  %s4 = inlined_call_operand.hbm [shape: f32[224,128], index: 4, kind: input, shape index: {}]
  %s5 = inlined_call_operand.vmem [shape: f32[1,128], index: 5, kind: input, shape index: {}]
  %s6 = inlined_call_operand.vmem [shape: f32[32,128], index: 6, kind: input, shape index: {}]
  %s7 = inlined_call_operand.hbm [shape: f32[224,128], index: 7, kind: input, shape index: {}]
  %s8 = inlined_call_operand.vmem [shape: f32[1,128], index: 8, kind: input, shape index: {}]
  %s9 = inlined_call_operand.hbm [shape: f32[8,128], index: 9, kind: output, shape index: {}]
  %s10 = sld [smem:[#allocation0]]
  $region58: #{tpu_custom_call.1} parent=0
    _
  %s12 = ssub.s32 1, %s10
  %s13 = scalar_select 0, %s12, %s10
  $region1: #{tpu_custom_call.1} parent=0
    #allocation4 [shape = 'u8[8192]{0}', space=vmem, size = 0x2000, scoped, tag = 'input window, operand 1, single buffered']
    #allocation5 [shape = 's32[1]{0}', space=sflag, size = 0x4, scoped, tag = 'scoped memory for tpu_custom_call.1']
    #allocation6 [shape = 's32[1]{0}', space=sflag, size = 0x4, scoped, tag = 'scoped memory for tpu_custom_call.1']
    #allocation7 [shape = 'u8[114688]{0}', space=vmem, size = 0x1c000, scoped, tag = 'input window, operand 4, single buffered']
    #allocation8 [shape = 's32[1]{0}', space=sflag, size = 0x4, scoped, tag = 'scoped memory for tpu_custom_call.1']
    #allocation9 [shape = 'u8[114688]{0}', space=vmem, size = 0x1c000, scoped, tag = 'input window, operand 7, single buffered']
    #allocation10 [shape = 'u8[4096]{0}', space=vmem, size = 0x1000, scoped, tag = 'output window, operand 0, single buffered']
    %14 = vsyncpa [#allocation5], 0
    %15 = vsyncpa [#allocation8], 0
    %16 = vsyncpa [#allocation6], 0
    // Predicated region
    $region2: #{tpu_custom_call.1} parent=1 // pred_check
      _
    $region3: #{tpu_custom_call.1} parent=1 // pred_check_branch
      %18 = sbr.rel (0) target = $region5
    $region4: #{tpu_custom_call.1} parent=1 // pred_region
      _
    $region5: #{tpu_custom_call.1} parent=1 // pred_fallthru
      _
    // Predicated region
    $region6: #{tpu_custom_call.1} parent=1 // pred_check
      _
    $region7: #{tpu_custom_call.1} parent=1 // pred_check_branch
      %20 = sbr.rel (0) target = $region9
    $region8: #{tpu_custom_call.1} parent=1 // pred_region
      %s22 = ssub.s32 256, 256
      %23 = vsyncadd [#allocation5], %s22
      %s24 = sshll.u32 [#allocation4], 4
      %s25 = int_to_ptr.vmem [resolvable:$true] %s24
      %30 = dma.hbm_to_vmem [thread:$0]  %s1, 256, %s25, [#allocation5], 128, 128, 8
    $region9: #{tpu_custom_call.1} parent=1 // pred_fallthru
      _
    // Predicated region
    $region10: #{tpu_custom_call.1} parent=1 // pred_check
      _
    $region11: #{tpu_custom_call.1} parent=1 // pred_check_branch
      %32 = sbr.rel (0) target = $region13
    $region12: #{tpu_custom_call.1} parent=1 // pred_region
      _
    $region13: #{tpu_custom_call.1} parent=1 // pred_fallthru
      _
    // Predicated region
    $region14: #{tpu_custom_call.1} parent=1 // pred_check
      _
    $region15: #{tpu_custom_call.1} parent=1 // pred_check_branch
      %34 = sbr.rel (0) target = $region17
    $region16: #{tpu_custom_call.1} parent=1 // pred_region
      _
    $region17: #{tpu_custom_call.1} parent=1 // pred_fallthru
      _
    // Predicated region
    $region18: #{tpu_custom_call.1} parent=1 // pred_check
      _
    $region19: #{tpu_custom_call.1} parent=1 // pred_check_branch
      %36 = sbr.rel (0) target = $region21
    $region20: #{tpu_custom_call.1} parent=1 // pred_region
      %s38 = ssub.s32 3584, 3584
      %39 = vsyncadd [#allocation8], %s38
      %s40 = sshll.u32 [#allocation7], 4
      %s41 = int_to_ptr.vmem [resolvable:$true] %s40
      %46 = dma.hbm_to_vmem [thread:$0]  %s4, 3584, %s41, [#allocation8], 128, 128, 8
    $region21: #{tpu_custom_call.1} parent=1 // pred_fallthru
      _
    // Predicated region
    $region22: #{tpu_custom_call.1} parent=1 // pred_check
      _
    $region23: #{tpu_custom_call.1} parent=1 // pred_check_branch
      %48 = sbr.rel (0) target = $region25
    $region24: #{tpu_custom_call.1} parent=1 // pred_region
      _
    $region25: #{tpu_custom_call.1} parent=1 // pred_fallthru
      _
    // Predicated region
    $region26: #{tpu_custom_call.1} parent=1 // pred_check
      _
    $region27: #{tpu_custom_call.1} parent=1 // pred_check_branch
      %50 = sbr.rel (0) target = $region29
    $region28: #{tpu_custom_call.1} parent=1 // pred_region
      _
    $region29: #{tpu_custom_call.1} parent=1 // pred_fallthru
      _
    // Predicated region
    $region30: #{tpu_custom_call.1} parent=1 // pred_check
      _
    $region31: #{tpu_custom_call.1} parent=1 // pred_check_branch
      %52 = sbr.rel (0) target = $region33
    $region32: #{tpu_custom_call.1} parent=1 // pred_region
      %s54 = ssub.s32 3584, 3584
      %55 = vsyncadd [#allocation8], %s54
      %s56 = sshll.u32 [#allocation9], 4
      %s57 = int_to_ptr.vmem [resolvable:$true] %s56
      %62 = dma.hbm_to_vmem [thread:$0]  %s7, 3584, %s57, [#allocation8], 128, 128, 8
    $region33: #{tpu_custom_call.1} parent=1 // pred_fallthru
      _
    // Predicated region
    $region34: #{tpu_custom_call.1} parent=1 // pred_check
      _
    $region35: #{tpu_custom_call.1} parent=1 // pred_check_branch
      %64 = sbr.rel (0) target = $region37
    $region36: #{tpu_custom_call.1} parent=1 // pred_region
      _
    $region37: #{tpu_custom_call.1} parent=1 // pred_fallthru
      _
    // Predicated region
    $region38: #{tpu_custom_call.1} parent=1 // pred_check
      _
    $region39: #{tpu_custom_call.1} parent=1 // pred_check_branch
      %66 = sbr.rel (0) target = $region41
    $region40: #{tpu_custom_call.1} parent=1 // pred_region
      %67 = dma.done [#allocation5], 256
    $region41: #{tpu_custom_call.1} parent=1 // pred_fallthru
      _
    // Predicated region
    $region42: #{tpu_custom_call.1} parent=1 // pred_check
      _
    $region43: #{tpu_custom_call.1} parent=1 // pred_check_branch
      %69 = sbr.rel (0) target = $region45
    $region44: #{tpu_custom_call.1} parent=1 // pred_region
      %70 = dma.done [#allocation8], 3584
    $region45: #{tpu_custom_call.1} parent=1 // pred_fallthru
      _
    // Predicated region
    $region46: #{tpu_custom_call.1} parent=1 // pred_check
      _
    $region47: #{tpu_custom_call.1} parent=1 // pred_check_branch
      %72 = sbr.rel (0) target = $region49
    $region48: #{tpu_custom_call.1} parent=1 // pred_region
      %73 = dma.done [#allocation8], 3584
    $region49: #{tpu_custom_call.1} parent=1 // pred_fallthru
      _
    %v74 = vld [vmem:[%s0] sm:$0xff]
    %v75 = vld [vmem:[%s0 + $0x8] sm:$0xff]
    %v76 = vld [vmem:[%s0 + $0x10] sm:$0xff]
    %v77 = vld [vmem:[%s0 + $0x18] sm:$0xff]
    %v78 = vld [vmem:[%s0 + $0x20] sm:$0xff]
    %v79 = vld [vmem:[%s0 + $0x28] sm:$0xff]
    %v80 = vld [vmem:[%s0 + $0x30] sm:$0xff]
    %v81 = vld [vmem:[#allocation4] sm:$0xff]
    %v82 = vld [vmem:[#allocation4 + $0x8] sm:$0xff]
    %v83 = vld [vmem:[%s3] sm:$0x1]
    %v85 = vlaneseq
    %v86 = vshrl.u32 %v85, 7
    %v87 = vsub.s32 0, %v86
    %v88 = vrot.slane %v83, %v87
    %vm90 = vcmask 130048
    %v92 = vsel %vm90, %v74, 0
    %v95 = vsel %vm90, %v75, 0
    %v98 = vsel %vm90, %v76, 0
    %v101 = vsel %vm90, %v77, 0
    %v104 = vsel %vm90, %v78, 0
    %v107 = vsel %vm90, %v79, 0
    %v110 = vsel %vm90, %v80, 0
    %112 = vmatprep.subr.mxu0 0.0
    %113 = vmatpush1.msra.mxu0 0.0
    %114 = vmatprep.subr.mxu0 0.0
    %115 = vmatpush1.msra.mxu0 0.0
    %116 = vmatprep.subr.mxu0 0.0
    %117 = vmatpush1.msra.mxu0 0.0
    %118 = vmatprep.subr.mxu0 0.0
    %119 = vmatpush1.msra.mxu0 0.0
    %120 = vmatprep.subr.mxu0 0.0
    %121 = vmatpush1.msra.mxu0 0.0
    %122 = vmatprep.subr.mxu0 0.0
    %123 = vmatpush1.msra.mxu0 0.0
    %124 = vmatprep.subr.mxu0 0.0
    %125 = vmatpush1.msra.mxu0 0.0
    %126 = vmatprep.subr.mxu0 0.0
    %127 = vmatpush1.msra.mxu0 0.0
    %128 = vmatprep.subr.mxu0 0.0
    %129 = vmatpush1.msra.mxu0 0.0
    %130 = vmatprep.subr.mxu0 0.0
    %131 = vmatpush1.msra.mxu0 0.0
    %132 = vmatprep.subr.mxu0 0.0
    %133 = vmatpush1.msra.mxu0 0.0
    %134 = vmatprep.subr.mxu0 0.0
    %135 = vmatpush1.msra.mxu0 0.0
    %136 = vmatprep.subr.mxu0 0.0
    %137 = vmatpush1.msra.mxu0 0.0
    %138 = vmatprep.subr.mxu0 0.0
    %139 = vmatpush1.msra.mxu0 0.0
    %140 = vmatprep.subr.mxu0 0.0
    %141 = vmatpush1.msra.mxu0 %v82
    %142 = vmatprep.subr.mxu0 0.0
    %143 = vmatpush1.msra.mxu0 %v81
    %144 = vmatprep.subr.mxu0 0.0
    %145 = vmatpush2.msra.mxu0 0.0
    %146 = vmatprep.subr.mxu0 0.0
    %147 = vmatpush2.msra.mxu0 0.0
    %148 = vmatprep.subr.mxu0 0.0
    %149 = vmatpush2.msra.mxu0 0.0
    %150 = vmatprep.subr.mxu0 0.0
    %151 = vmatpush2.msra.mxu0 0.0
    %152 = vmatprep.subr.mxu0 0.0
    %153 = vmatpush2.msra.mxu0 0.0
    %154 = vmatprep.subr.mxu0 0.0
    %155 = vmatpush2.msra.mxu0 0.0
    %156 = vmatprep.subr.mxu0 0.0
    %157 = vmatpush2.msra.mxu0 0.0
    %158 = vmatprep.subr.mxu0 0.0
    %159 = vmatpush2.msra.mxu0 0.0
    %160 = vmatprep.subr.mxu0 0.0
    %161 = vmatpush2.msra.mxu0 0.0
    %162 = vmatprep.subr.mxu0 0.0
    %163 = vmatpush2.msra.mxu0 0.0
    %164 = vmatprep.subr.mxu0 0.0
    %165 = vmatpush2.msra.mxu0 0.0
    %166 = vmatprep.subr.mxu0 0.0
    %167 = vmatpush2.msra.mxu0 0.0
    %168 = vmatprep.subr.mxu0 0.0
    %169 = vmatpush2.msra.mxu0 0.0
    %170 = vmatprep.subr.mxu0 0.0
    %171 = vmatpush2.msra.mxu0 0.0
    %172 = vmatprep.subr.mxu0 0.0
    %173 = vmatpush2.msra.mxu0 0.0
    %174 = vmatprep.subr.mxu0 0.0
    %175 = vmatpush2.msra.mxu0 0.0
    %176 = vmatprep.mubr.f32.mxu0 0.0
    %177 = vmatmul.mubr.f32.gmra.mxu0 %v92
    %v178 = vpop.f32.mrf.mxu0
    %v179 = vadd.f32 %v88, %v178
    %v180 = vpop.f32.mrf.mxu0
    %181 = vmatprep.mubr.f32.mxu0 0.0
    %182 = vmatmul.mubr.f32.gmra.mxu0 %v95
    %v183 = vpop.f32.mrf.mxu0
    %v184 = vadd.f32 %v88, %v183
    %v185 = vpop.f32.mrf.mxu0
    %186 = vmatprep.mubr.f32.mxu0 0.0
    %187 = vmatmul.mubr.f32.gmra.mxu0 %v98
    %v188 = vpop.f32.mrf.mxu0
    %v189 = vadd.f32 %v88, %v188
    %v190 = vpop.f32.mrf.mxu0
    %191 = vmatprep.mubr.f32.mxu0 0.0
    %192 = vmatmul.mubr.f32.gmra.mxu0 %v101
    %v193 = vpop.f32.mrf.mxu0
    %v194 = vadd.f32 %v88, %v193
    %v195 = vpop.f32.mrf.mxu0
    %196 = vmatprep.mubr.f32.mxu0 0.0
    %197 = vmatmul.mubr.f32.gmra.mxu0 %v104
    %v198 = vpop.f32.mrf.mxu0
    %v199 = vadd.f32 %v88, %v198
    %v200 = vpop.f32.mrf.mxu0
    %201 = vmatprep.mubr.f32.mxu0 0.0
    %202 = vmatmul.mubr.f32.gmra.mxu0 %v107
    %v203 = vpop.f32.mrf.mxu0
    %v204 = vadd.f32 %v88, %v203
    %v205 = vpop.f32.mrf.mxu0
    %206 = vmatprep.mubr.f32.mxu0 0.0
    %207 = vmatmul.mubr.f32.gmra.mxu0 %v110
    %v208 = vpop.f32.mrf.mxu0
    %v209 = vadd.f32 %v88, %v208
    %v210 = vpop.f32.mrf.mxu0
    %211 = vdwg.mxu0
    %v212 = vld [vmem:[%s2] sm:$0xff]
    %v213 = vld [vmem:[%s2 + $0x8] sm:$0xff]
    %v214 = vld [vmem:[%s2 + $0x10] sm:$0xff]
    %v215 = vld [vmem:[%s2 + $0x18] sm:$0xff]
    %vm216 = vcmask 261120
    %v218 = vsel %vm216, 0.0, 0
    %220 = vmatprep.subr.mxu0 0.0
    %221 = vmatpush1.msra.mxu0 0.0
    %222 = vmatprep.subr.mxu0 0.0
    %223 = vmatpush1.msra.mxu0 0.0
    %224 = vmatprep.subr.mxu0 0.0
    %225 = vmatpush1.msra.mxu0 0.0
    %226 = vmatprep.subr.mxu0 0.0
    %227 = vmatpush1.msra.mxu0 0.0
    %228 = vmatprep.subr.mxu0 0.0
    %229 = vmatpush1.msra.mxu0 0.0
    %230 = vmatprep.subr.mxu0 0.0
    %231 = vmatpush1.msra.mxu0 0.0
    %232 = vmatprep.subr.mxu0 0.0
    %233 = vmatpush1.msra.mxu0 0.0
    %234 = vmatprep.subr.mxu0 0.0
    %235 = vmatpush1.msra.mxu0 0.0
    %236 = vmatprep.subr.mxu0 0.0
    %237 = vmatpush1.msra.mxu0 0.0
    %238 = vmatprep.subr.mxu0 0.0
    %239 = vmatpush1.msra.mxu0 0.0
    %240 = vmatprep.subr.mxu0 0.0
    %241 = vmatpush1.msra.mxu0 0.0
    %242 = vmatprep.subr.mxu0 0.0
    %243 = vmatpush1.msra.mxu0 0.0
    %244 = vmatprep.subr.mxu0 0.0
    %245 = vmatpush1.msra.mxu0 %v215
    %246 = vmatprep.subr.mxu0 0.0
    %247 = vmatpush1.msra.mxu0 %v214
    %248 = vmatprep.subr.mxu0 0.0
    %249 = vmatpush1.msra.mxu0 %v213
    %250 = vmatprep.subr.mxu0 0.0
    %251 = vmatpush1.msra.mxu0 %v212
    %252 = vmatprep.subr.mxu0 0.0
    %253 = vmatpush2.msra.mxu0 0.0
    %254 = vmatprep.subr.mxu0 0.0
    %255 = vmatpush2.msra.mxu0 0.0
    %256 = vmatprep.subr.mxu0 0.0
    %257 = vmatpush2.msra.mxu0 0.0
    %258 = vmatprep.subr.mxu0 0.0
    %259 = vmatpush2.msra.mxu0 0.0
    %260 = vmatprep.subr.mxu0 0.0
    %261 = vmatpush2.msra.mxu0 0.0
    %262 = vmatprep.subr.mxu0 0.0
    %263 = vmatpush2.msra.mxu0 0.0
    %264 = vmatprep.subr.mxu0 0.0
    %265 = vmatpush2.msra.mxu0 0.0
    %266 = vmatprep.subr.mxu0 0.0
    %267 = vmatpush2.msra.mxu0 0.0
    %268 = vmatprep.subr.mxu0 0.0
    %269 = vmatpush2.msra.mxu0 0.0
    %270 = vmatprep.subr.mxu0 0.0
    %271 = vmatpush2.msra.mxu0 0.0
    %272 = vmatprep.subr.mxu0 0.0
    %273 = vmatpush2.msra.mxu0 0.0
    %274 = vmatprep.subr.mxu0 0.0
    %275 = vmatpush2.msra.mxu0 0.0
    %276 = vmatprep.subr.mxu0 0.0
    %277 = vmatpush2.msra.mxu0 0.0
    %278 = vmatprep.subr.mxu0 0.0
    %279 = vmatpush2.msra.mxu0 0.0
    %280 = vmatprep.subr.mxu0 0.0
    %281 = vmatpush2.msra.mxu0 0.0
    %282 = vmatprep.subr.mxu0 0.0
    %283 = vmatpush2.msra.mxu0 0.0
    %284 = vmatprep.mubr.f32.mxu0 0.0
    %285 = vmatmul.mubr.f32.gmra.mxu0 %v218
    %v286 = vpop.f32.mrf.mxu0
    %v287 = vadd.f32 0.0, %v286
    %v288 = vpop.f32.mrf.mxu0
    %289 = vdwg.mxu0
    %v290 = vadd.f32 %v179, %v287
    %v291 = vxor.u32 %v290, 2147483648
    %v292 = vmul.f32 %v291, 1.442695
    %v293 = vpow.pop %v292
    %v294 = vadd.f32 %v293, 1.0
    %v295 = vrcp.pop %v294
    %v296 = vmul.f32 1.0, %v295
    %v297 = vmul.f32 %v296, 2.0
    %v298 = vsub.f32 %v297, 1.0
    %v299 = vmul.f32 %v296, 0.0
    %301 = vrot.lane.b32.xlu0 %v298, 64
    %v302 = vpop.permute.xlu0 %301
    %v304 = vmul.f32 %v296, %v302
    %306 = vrot.lane.b32.xlu0 %v304, 32
    %v307 = vpop.permute.xlu0 %306
    %v309 = vadd.f32 %v299, %v307
    %v310 = vtanh.pop %v309
    %312 = vrot.lane.b32.xlu0 %v310, 64
    %v313 = vpop.permute.xlu0 %312
    %v315 = vmul.f32 %v296, %v313
    %v316 = vmax.f32 %v315, 0.0
    %318 = vrot.lane.b32.xlu0 %v316, 32
    %v319 = vpop.permute.xlu0 %318
    %321 = vst.msk [vmem:[#allocation2] sm:$0xff] %vm216, %v319
    %323 = vrot.lane.b32.xlu0 %v315, 32
    %v324 = vpop.permute.xlu0 %323
    %v325 = vsel %vm216, %v324, 0
    %327 = vmatprep.subr.mxu0 0.0
    %328 = vmatpush1.msra.mxu0 0.0
    %329 = vmatprep.subr.mxu0 0.0
    %330 = vmatpush1.msra.mxu0 0.0
    %331 = vmatprep.subr.mxu0 0.0
    %332 = vmatpush1.msra.mxu0 0.0
    %333 = vmatprep.subr.mxu0 0.0
    %334 = vmatpush1.msra.mxu0 0.0
    %335 = vmatprep.subr.mxu0 0.0
    %336 = vmatpush1.msra.mxu0 0.0
    %337 = vmatprep.subr.mxu0 0.0
    %338 = vmatpush1.msra.mxu0 0.0
    %339 = vmatprep.subr.mxu0 0.0
    %340 = vmatpush1.msra.mxu0 0.0
    %341 = vmatprep.subr.mxu0 0.0
    %342 = vmatpush1.msra.mxu0 0.0
    %343 = vmatprep.subr.mxu0 0.0
    %344 = vmatpush1.msra.mxu0 0.0
    %345 = vmatprep.subr.mxu0 0.0
    %346 = vmatpush1.msra.mxu0 0.0
    %347 = vmatprep.subr.mxu0 0.0
    %348 = vmatpush1.msra.mxu0 0.0
    %349 = vmatprep.subr.mxu0 0.0
    %350 = vmatpush1.msra.mxu0 0.0
    %351 = vmatprep.subr.mxu0 0.0
    %352 = vmatpush1.msra.mxu0 %v215
    %353 = vmatprep.subr.mxu0 0.0
    %354 = vmatpush1.msra.mxu0 %v214
    %355 = vmatprep.subr.mxu0 0.0
    %356 = vmatpush1.msra.mxu0 %v213
    %357 = vmatprep.subr.mxu0 0.0
    %358 = vmatpush1.msra.mxu0 %v212
    %359 = vmatprep.subr.mxu0 0.0
    %360 = vmatpush2.msra.mxu0 0.0
    %361 = vmatprep.subr.mxu0 0.0
    %362 = vmatpush2.msra.mxu0 0.0
    %363 = vmatprep.subr.mxu0 0.0
    %364 = vmatpush2.msra.mxu0 0.0
    %365 = vmatprep.subr.mxu0 0.0
    %366 = vmatpush2.msra.mxu0 0.0
    %367 = vmatprep.subr.mxu0 0.0
    %368 = vmatpush2.msra.mxu0 0.0
    %369 = vmatprep.subr.mxu0 0.0
    %370 = vmatpush2.msra.mxu0 0.0
    %371 = vmatprep.subr.mxu0 0.0
    %372 = vmatpush2.msra.mxu0 0.0
    %373 = vmatprep.subr.mxu0 0.0
    %374 = vmatpush2.msra.mxu0 0.0
    %375 = vmatprep.subr.mxu0 0.0
    %376 = vmatpush2.msra.mxu0 0.0
    %377 = vmatprep.subr.mxu0 0.0
    %378 = vmatpush2.msra.mxu0 0.0
    %379 = vmatprep.subr.mxu0 0.0
    %380 = vmatpush2.msra.mxu0 0.0
    %381 = vmatprep.subr.mxu0 0.0
    %382 = vmatpush2.msra.mxu0 0.0
    %383 = vmatprep.subr.mxu0 0.0
    %384 = vmatpush2.msra.mxu0 0.0
    %385 = vmatprep.subr.mxu0 0.0
    %386 = vmatpush2.msra.mxu0 0.0
    %387 = vmatprep.subr.mxu0 0.0
    %388 = vmatpush2.msra.mxu0 0.0
    %389 = vmatprep.subr.mxu0 0.0
    %390 = vmatpush2.msra.mxu0 0.0
    %391 = vmatprep.mubr.f32.mxu0 0.0
    %392 = vmatmul.mubr.f32.gmra.mxu0 %v325
    %v393 = vpop.f32.mrf.mxu0
    %v394 = vadd.f32 0.0, %v393
    %v395 = vpop.f32.mrf.mxu0
    %396 = vdwg.mxu0
    %v397 = vadd.f32 %v184, %v394
    %v398 = vxor.u32 %v397, 2147483648
    %v399 = vmul.f32 %v398, 1.442695
    %v400 = vpow.pop %v399
    %v401 = vadd.f32 %v400, 1.0
    %v402 = vrcp.pop %v401
    %v403 = vmul.f32 1.0, %v402
    %v404 = vmul.f32 %v403, 2.0
    %v405 = vsub.f32 %v404, 1.0
    %v406 = vmul.f32 %v403, %v309
    %408 = vrot.lane.b32.xlu0 %v405, 64
    %v409 = vpop.permute.xlu0 %408
    %v411 = vmul.f32 %v403, %v409
    %413 = vrot.lane.b32.xlu0 %v411, 32
    %v414 = vpop.permute.xlu0 %413
    %v416 = vadd.f32 %v406, %v414
    %v417 = vtanh.pop %v416
    %419 = vrot.lane.b32.xlu0 %v417, 64
    %v420 = vpop.permute.xlu0 %419
    %v422 = vmul.f32 %v403, %v420
    %v423 = vmax.f32 %v422, 0.0
    %425 = vrot.lane.b32.xlu0 %v423, 64
    %v426 = vpop.permute.xlu0 %425
    %vm428 = vcmask 523520
    %429 = vst.msk [vmem:[#allocation2] sm:$0xff] %vm428, %v426
    %431 = vrot.lane.b32.xlu0 %v422, 32
    %v432 = vpop.permute.xlu0 %431
    %v433 = vsel %vm216, %v432, 0
    %435 = vmatprep.subr.mxu0 0.0
    %436 = vmatpush1.msra.mxu0 0.0
    %437 = vmatprep.subr.mxu0 0.0
    %438 = vmatpush1.msra.mxu0 0.0
    %439 = vmatprep.subr.mxu0 0.0
    %440 = vmatpush1.msra.mxu0 0.0
    %441 = vmatprep.subr.mxu0 0.0
    %442 = vmatpush1.msra.mxu0 0.0
    %443 = vmatprep.subr.mxu0 0.0
    %444 = vmatpush1.msra.mxu0 0.0
    %445 = vmatprep.subr.mxu0 0.0
    %446 = vmatpush1.msra.mxu0 0.0
    %447 = vmatprep.subr.mxu0 0.0
    %448 = vmatpush1.msra.mxu0 0.0
    %449 = vmatprep.subr.mxu0 0.0
    %450 = vmatpush1.msra.mxu0 0.0
    %451 = vmatprep.subr.mxu0 0.0
    %452 = vmatpush1.msra.mxu0 0.0
    %453 = vmatprep.subr.mxu0 0.0
    %454 = vmatpush1.msra.mxu0 0.0
    %455 = vmatprep.subr.mxu0 0.0
    %456 = vmatpush1.msra.mxu0 0.0
    %457 = vmatprep.subr.mxu0 0.0
    %458 = vmatpush1.msra.mxu0 0.0
    %459 = vmatprep.subr.mxu0 0.0
    %460 = vmatpush1.msra.mxu0 %v215
    %461 = vmatprep.subr.mxu0 0.0
    %462 = vmatpush1.msra.mxu0 %v214
    %463 = vmatprep.subr.mxu0 0.0
    %464 = vmatpush1.msra.mxu0 %v213
    %465 = vmatprep.subr.mxu0 0.0
    %466 = vmatpush1.msra.mxu0 %v212
    %467 = vmatprep.subr.mxu0 0.0
    %468 = vmatpush2.msra.mxu0 0.0
    %469 = vmatprep.subr.mxu0 0.0
    %470 = vmatpush2.msra.mxu0 0.0
    %471 = vmatprep.subr.mxu0 0.0
    %472 = vmatpush2.msra.mxu0 0.0
    %473 = vmatprep.subr.mxu0 0.0
    %474 = vmatpush2.msra.mxu0 0.0
    %475 = vmatprep.subr.mxu0 0.0
    %476 = vmatpush2.msra.mxu0 0.0
    %477 = vmatprep.subr.mxu0 0.0
    %478 = vmatpush2.msra.mxu0 0.0
    %479 = vmatprep.subr.mxu0 0.0
    %480 = vmatpush2.msra.mxu0 0.0
    %481 = vmatprep.subr.mxu0 0.0
    %482 = vmatpush2.msra.mxu0 0.0
    %483 = vmatprep.subr.mxu0 0.0
    %484 = vmatpush2.msra.mxu0 0.0
    %485 = vmatprep.subr.mxu0 0.0
    %486 = vmatpush2.msra.mxu0 0.0
    %487 = vmatprep.subr.mxu0 0.0
    %488 = vmatpush2.msra.mxu0 0.0
    %489 = vmatprep.subr.mxu0 0.0
    %490 = vmatpush2.msra.mxu0 0.0
    %491 = vmatprep.subr.mxu0 0.0
    %492 = vmatpush2.msra.mxu0 0.0
    %493 = vmatprep.subr.mxu0 0.0
    %494 = vmatpush2.msra.mxu0 0.0
    %495 = vmatprep.subr.mxu0 0.0
    %496 = vmatpush2.msra.mxu0 0.0
    %497 = vmatprep.subr.mxu0 0.0
    %498 = vmatpush2.msra.mxu0 0.0
    %499 = vmatprep.mubr.f32.mxu0 0.0
    %500 = vmatmul.mubr.f32.gmra.mxu0 %v433
    %v501 = vpop.f32.mrf.mxu0
    %v502 = vadd.f32 0.0, %v501
    %v503 = vpop.f32.mrf.mxu0
    %504 = vdwg.mxu0
    %v505 = vadd.f32 %v189, %v502
    %v506 = vxor.u32 %v505, 2147483648
    %v507 = vmul.f32 %v506, 1.442695
    %v508 = vpow.pop %v507
    %v509 = vadd.f32 %v508, 1.0
    %v510 = vrcp.pop %v509
    %v511 = vmul.f32 1.0, %v510
    %v512 = vmul.f32 %v511, 2.0
    %v513 = vsub.f32 %v512, 1.0
    %v514 = vmul.f32 %v511, %v416
    %516 = vrot.lane.b32.xlu0 %v513, 64
    %v517 = vpop.permute.xlu0 %516
    %v519 = vmul.f32 %v511, %v517
    %521 = vrot.lane.b32.xlu0 %v519, 32
    %v522 = vpop.permute.xlu0 %521
    %v524 = vadd.f32 %v514, %v522
    %v525 = vtanh.pop %v524
    %527 = vrot.lane.b32.xlu0 %v525, 64
    %v528 = vpop.permute.xlu0 %527
    %v530 = vmul.f32 %v511, %v528
    %v531 = vmax.f32 %v530, 0.0
    %533 = vrot.lane.b32.xlu0 %v531, 96
    %v534 = vpop.permute.xlu0 %533
    %vm536 = vcmask 785920
    %537 = vst.msk [vmem:[#allocation2] sm:$0xff] %vm536, %v534
    %539 = vrot.lane.b32.xlu0 %v530, 32
    %v540 = vpop.permute.xlu0 %539
    %v541 = vsel %vm216, %v540, 0
    %543 = vmatprep.subr.mxu0 0.0
    %544 = vmatpush1.msra.mxu0 0.0
    %545 = vmatprep.subr.mxu0 0.0
    %546 = vmatpush1.msra.mxu0 0.0
    %547 = vmatprep.subr.mxu0 0.0
    %548 = vmatpush1.msra.mxu0 0.0
    %549 = vmatprep.subr.mxu0 0.0
    %550 = vmatpush1.msra.mxu0 0.0
    %551 = vmatprep.subr.mxu0 0.0
    %552 = vmatpush1.msra.mxu0 0.0
    %553 = vmatprep.subr.mxu0 0.0
    %554 = vmatpush1.msra.mxu0 0.0
    %555 = vmatprep.subr.mxu0 0.0
    %556 = vmatpush1.msra.mxu0 0.0
    %557 = vmatprep.subr.mxu0 0.0
    %558 = vmatpush1.msra.mxu0 0.0
    %559 = vmatprep.subr.mxu0 0.0
    %560 = vmatpush1.msra.mxu0 0.0
    %561 = vmatprep.subr.mxu0 0.0
    %562 = vmatpush1.msra.mxu0 0.0
    %563 = vmatprep.subr.mxu0 0.0
    %564 = vmatpush1.msra.mxu0 0.0
    %565 = vmatprep.subr.mxu0 0.0
    %566 = vmatpush1.msra.mxu0 0.0
    %567 = vmatprep.subr.mxu0 0.0
    %568 = vmatpush1.msra.mxu0 %v215
    %569 = vmatprep.subr.mxu0 0.0
    %570 = vmatpush1.msra.mxu0 %v214
    %571 = vmatprep.subr.mxu0 0.0
    %572 = vmatpush1.msra.mxu0 %v213
    %573 = vmatprep.subr.mxu0 0.0
    %574 = vmatpush1.msra.mxu0 %v212
    %575 = vmatprep.subr.mxu0 0.0
    %576 = vmatpush2.msra.mxu0 0.0
    %577 = vmatprep.subr.mxu0 0.0
    %578 = vmatpush2.msra.mxu0 0.0
    %579 = vmatprep.subr.mxu0 0.0
    %580 = vmatpush2.msra.mxu0 0.0
    %581 = vmatprep.subr.mxu0 0.0
    %582 = vmatpush2.msra.mxu0 0.0
    %583 = vmatprep.subr.mxu0 0.0
    %584 = vmatpush2.msra.mxu0 0.0
    %585 = vmatprep.subr.mxu0 0.0
    %586 = vmatpush2.msra.mxu0 0.0
    %587 = vmatprep.subr.mxu0 0.0
    %588 = vmatpush2.msra.mxu0 0.0
    %589 = vmatprep.subr.mxu0 0.0
    %590 = vmatpush2.msra.mxu0 0.0
    %591 = vmatprep.subr.mxu0 0.0
    %592 = vmatpush2.msra.mxu0 0.0
    %593 = vmatprep.subr.mxu0 0.0
    %594 = vmatpush2.msra.mxu0 0.0
    %595 = vmatprep.subr.mxu0 0.0
    %596 = vmatpush2.msra.mxu0 0.0
    %597 = vmatprep.subr.mxu0 0.0
    %598 = vmatpush2.msra.mxu0 0.0
    %599 = vmatprep.subr.mxu0 0.0
    %600 = vmatpush2.msra.mxu0 0.0
    %601 = vmatprep.subr.mxu0 0.0
    %602 = vmatpush2.msra.mxu0 0.0
    %603 = vmatprep.subr.mxu0 0.0
    %604 = vmatpush2.msra.mxu0 0.0
    %605 = vmatprep.subr.mxu0 0.0
    %606 = vmatpush2.msra.mxu0 0.0
    %607 = vmatprep.mubr.f32.mxu0 0.0
    %608 = vmatmul.mubr.f32.gmra.mxu0 %v541
    %v609 = vpop.f32.mrf.mxu0
    %v610 = vadd.f32 0.0, %v609
    %v611 = vpop.f32.mrf.mxu0
    %612 = vdwg.mxu0
    %v613 = vadd.f32 %v194, %v610
    %v614 = vxor.u32 %v613, 2147483648
    %v615 = vmul.f32 %v614, 1.442695
    %v616 = vpow.pop %v615
    %v617 = vadd.f32 %v616, 1.0
    %v618 = vrcp.pop %v617
    %v619 = vmul.f32 1.0, %v618
    %v620 = vmul.f32 %v619, 2.0
    %v621 = vsub.f32 %v620, 1.0
    %v622 = vmul.f32 %v619, %v524
    %624 = vrot.lane.b32.xlu0 %v621, 64
    %v625 = vpop.permute.xlu0 %624
    %v627 = vmul.f32 %v619, %v625
    %629 = vrot.lane.b32.xlu0 %v627, 32
    %v630 = vpop.permute.xlu0 %629
    %v632 = vadd.f32 %v622, %v630
    %v633 = vtanh.pop %v632
    %635 = vrot.lane.b32.xlu0 %v633, 64
    %v636 = vpop.permute.xlu0 %635
    %v638 = vmul.f32 %v619, %v636
    %v639 = vmax.f32 %v638, 0.0
    %vm640 = vcmask 1048320
    %641 = vst.msk [vmem:[#allocation2] sm:$0xff] %vm640, %v639
    %643 = vrot.lane.b32.xlu0 %v638, 32
    %v644 = vpop.permute.xlu0 %643
    %v645 = vsel %vm216, %v644, 0
    %647 = vmatprep.subr.mxu0 0.0
    %648 = vmatpush1.msra.mxu0 0.0
    %649 = vmatprep.subr.mxu0 0.0
    %650 = vmatpush1.msra.mxu0 0.0
    %651 = vmatprep.subr.mxu0 0.0
    %652 = vmatpush1.msra.mxu0 0.0
    %653 = vmatprep.subr.mxu0 0.0
    %654 = vmatpush1.msra.mxu0 0.0
    %655 = vmatprep.subr.mxu0 0.0
    %656 = vmatpush1.msra.mxu0 0.0
    %657 = vmatprep.subr.mxu0 0.0
    %658 = vmatpush1.msra.mxu0 0.0
    %659 = vmatprep.subr.mxu0 0.0
    %660 = vmatpush1.msra.mxu0 0.0
    %661 = vmatprep.subr.mxu0 0.0
    %662 = vmatpush1.msra.mxu0 0.0
    %663 = vmatprep.subr.mxu0 0.0
    %664 = vmatpush1.msra.mxu0 0.0
    %665 = vmatprep.subr.mxu0 0.0
    %666 = vmatpush1.msra.mxu0 0.0
    %667 = vmatprep.subr.mxu0 0.0
    %668 = vmatpush1.msra.mxu0 0.0
    %669 = vmatprep.subr.mxu0 0.0
    %670 = vmatpush1.msra.mxu0 0.0
    %671 = vmatprep.subr.mxu0 0.0
    %672 = vmatpush1.msra.mxu0 %v215
    %673 = vmatprep.subr.mxu0 0.0
    %674 = vmatpush1.msra.mxu0 %v214
    %675 = vmatprep.subr.mxu0 0.0
    %676 = vmatpush1.msra.mxu0 %v213
    %677 = vmatprep.subr.mxu0 0.0
    %678 = vmatpush1.msra.mxu0 %v212
    %679 = vmatprep.subr.mxu0 0.0
    %680 = vmatpush2.msra.mxu0 0.0
    %681 = vmatprep.subr.mxu0 0.0
    %682 = vmatpush2.msra.mxu0 0.0
    %683 = vmatprep.subr.mxu0 0.0
    %684 = vmatpush2.msra.mxu0 0.0
    %685 = vmatprep.subr.mxu0 0.0
    %686 = vmatpush2.msra.mxu0 0.0
    %687 = vmatprep.subr.mxu0 0.0
    %688 = vmatpush2.msra.mxu0 0.0
    %689 = vmatprep.subr.mxu0 0.0
    %690 = vmatpush2.msra.mxu0 0.0
    %691 = vmatprep.subr.mxu0 0.0
    %692 = vmatpush2.msra.mxu0 0.0
    %693 = vmatprep.subr.mxu0 0.0
    %694 = vmatpush2.msra.mxu0 0.0
    %695 = vmatprep.subr.mxu0 0.0
    %696 = vmatpush2.msra.mxu0 0.0
    %697 = vmatprep.subr.mxu0 0.0
    %698 = vmatpush2.msra.mxu0 0.0
    %699 = vmatprep.subr.mxu0 0.0
    %700 = vmatpush2.msra.mxu0 0.0
    %701 = vmatprep.subr.mxu0 0.0
    %702 = vmatpush2.msra.mxu0 0.0
    %703 = vmatprep.subr.mxu0 0.0
    %704 = vmatpush2.msra.mxu0 0.0
    %705 = vmatprep.subr.mxu0 0.0
    %706 = vmatpush2.msra.mxu0 0.0
    %707 = vmatprep.subr.mxu0 0.0
    %708 = vmatpush2.msra.mxu0 0.0
    %709 = vmatprep.subr.mxu0 0.0
    %710 = vmatpush2.msra.mxu0 0.0
    %711 = vmatprep.mubr.f32.mxu0 0.0
    %712 = vmatmul.mubr.f32.gmra.mxu0 %v645
    %v713 = vpop.f32.mrf.mxu0
    %v714 = vadd.f32 0.0, %v713
    %v715 = vpop.f32.mrf.mxu0
    %716 = vdwg.mxu0
    %v717 = vadd.f32 %v199, %v714
    %v718 = vxor.u32 %v717, 2147483648
    %v719 = vmul.f32 %v718, 1.442695
    %v720 = vpow.pop %v719
    %v721 = vadd.f32 %v720, 1.0
    %v722 = vrcp.pop %v721
    %v723 = vmul.f32 1.0, %v722
    %v724 = vmul.f32 %v723, 2.0
    %v725 = vsub.f32 %v724, 1.0
    %v726 = vmul.f32 %v723, %v632
    %728 = vrot.lane.b32.xlu0 %v725, 64
    %v729 = vpop.permute.xlu0 %728
    %v731 = vmul.f32 %v723, %v729
    %733 = vrot.lane.b32.xlu0 %v731, 32
    %v734 = vpop.permute.xlu0 %733
    %v736 = vadd.f32 %v726, %v734
    %v737 = vtanh.pop %v736
    %739 = vrot.lane.b32.xlu0 %v737, 64
    %v740 = vpop.permute.xlu0 %739
    %v742 = vmul.f32 %v723, %v740
    %v743 = vmax.f32 %v742, 0.0
    %745 = vrot.lane.b32.xlu0 %v743, 32
    %v746 = vpop.permute.xlu0 %745
    %748 = vst.msk [vmem:[#allocation2 + $0x8] sm:$0xff] %vm216, %v746
    %750 = vrot.lane.b32.xlu0 %v742, 32
    %v751 = vpop.permute.xlu0 %750
    %v752 = vsel %vm216, %v751, 0
    %754 = vmatprep.subr.mxu0 0.0
    %755 = vmatpush1.msra.mxu0 0.0
    %756 = vmatprep.subr.mxu0 0.0
    %757 = vmatpush1.msra.mxu0 0.0
    %758 = vmatprep.subr.mxu0 0.0
    %759 = vmatpush1.msra.mxu0 0.0
    %760 = vmatprep.subr.mxu0 0.0
    %761 = vmatpush1.msra.mxu0 0.0
    %762 = vmatprep.subr.mxu0 0.0
    %763 = vmatpush1.msra.mxu0 0.0
    %764 = vmatprep.subr.mxu0 0.0
    %765 = vmatpush1.msra.mxu0 0.0
    %766 = vmatprep.subr.mxu0 0.0
    %767 = vmatpush1.msra.mxu0 0.0
    %768 = vmatprep.subr.mxu0 0.0
    %769 = vmatpush1.msra.mxu0 0.0
    %770 = vmatprep.subr.mxu0 0.0
    %771 = vmatpush1.msra.mxu0 0.0
    %772 = vmatprep.subr.mxu0 0.0
    %773 = vmatpush1.msra.mxu0 0.0
    %774 = vmatprep.subr.mxu0 0.0
    %775 = vmatpush1.msra.mxu0 0.0
    %776 = vmatprep.subr.mxu0 0.0
    %777 = vmatpush1.msra.mxu0 0.0
    %778 = vmatprep.subr.mxu0 0.0
    %779 = vmatpush1.msra.mxu0 %v215
    %780 = vmatprep.subr.mxu0 0.0
    %781 = vmatpush1.msra.mxu0 %v214
    %782 = vmatprep.subr.mxu0 0.0
    %783 = vmatpush1.msra.mxu0 %v213
    %784 = vmatprep.subr.mxu0 0.0
    %785 = vmatpush1.msra.mxu0 %v212
    %786 = vmatprep.subr.mxu0 0.0
    %787 = vmatpush2.msra.mxu0 0.0
    %788 = vmatprep.subr.mxu0 0.0
    %789 = vmatpush2.msra.mxu0 0.0
    %790 = vmatprep.subr.mxu0 0.0
    %791 = vmatpush2.msra.mxu0 0.0
    %792 = vmatprep.subr.mxu0 0.0
    %793 = vmatpush2.msra.mxu0 0.0
    %794 = vmatprep.subr.mxu0 0.0
    %795 = vmatpush2.msra.mxu0 0.0
    %796 = vmatprep.subr.mxu0 0.0
    %797 = vmatpush2.msra.mxu0 0.0
    %798 = vmatprep.subr.mxu0 0.0
    %799 = vmatpush2.msra.mxu0 0.0
    %800 = vmatprep.subr.mxu0 0.0
    %801 = vmatpush2.msra.mxu0 0.0
    %802 = vmatprep.subr.mxu0 0.0
    %803 = vmatpush2.msra.mxu0 0.0
    %804 = vmatprep.subr.mxu0 0.0
    %805 = vmatpush2.msra.mxu0 0.0
    %806 = vmatprep.subr.mxu0 0.0
    %807 = vmatpush2.msra.mxu0 0.0
    %808 = vmatprep.subr.mxu0 0.0
    %809 = vmatpush2.msra.mxu0 0.0
    %810 = vmatprep.subr.mxu0 0.0
    %811 = vmatpush2.msra.mxu0 0.0
    %812 = vmatprep.subr.mxu0 0.0
    %813 = vmatpush2.msra.mxu0 0.0
    %814 = vmatprep.subr.mxu0 0.0
    %815 = vmatpush2.msra.mxu0 0.0
    %816 = vmatprep.subr.mxu0 0.0
    %817 = vmatpush2.msra.mxu0 0.0
    %818 = vmatprep.mubr.f32.mxu0 0.0
    %819 = vmatmul.mubr.f32.gmra.mxu0 %v752
    %v820 = vpop.f32.mrf.mxu0
    %v821 = vadd.f32 0.0, %v820
    %v822 = vpop.f32.mrf.mxu0
    %823 = vdwg.mxu0
    %v824 = vadd.f32 %v204, %v821
    %v825 = vxor.u32 %v824, 2147483648
    %v826 = vmul.f32 %v825, 1.442695
    %v827 = vpow.pop %v826
    %v828 = vadd.f32 %v827, 1.0
    %v829 = vrcp.pop %v828
    %v830 = vmul.f32 1.0, %v829
    %v831 = vmul.f32 %v830, 2.0
    %v832 = vsub.f32 %v831, 1.0
    %v833 = vmul.f32 %v830, %v736
    %835 = vrot.lane.b32.xlu0 %v832, 64
    %v836 = vpop.permute.xlu0 %835
    %v838 = vmul.f32 %v830, %v836
    %840 = vrot.lane.b32.xlu0 %v838, 32
    %v841 = vpop.permute.xlu0 %840
    %v843 = vadd.f32 %v833, %v841
    %v844 = vtanh.pop %v843
    %846 = vrot.lane.b32.xlu0 %v844, 64
    %v847 = vpop.permute.xlu0 %846
    %v849 = vmul.f32 %v830, %v847
    %v850 = vmax.f32 %v849, 0.0
    %852 = vrot.lane.b32.xlu0 %v850, 64
    %v853 = vpop.permute.xlu0 %852
    %855 = vst.msk [vmem:[#allocation2 + $0x8] sm:$0xff] %vm428, %v853
    %857 = vrot.lane.b32.xlu0 %v849, 32
    %v858 = vpop.permute.xlu0 %857
    %v859 = vsel %vm216, %v858, 0
    %861 = vmatprep.subr.mxu0 0.0
    %862 = vmatpush1.msra.mxu0 0.0
    %863 = vmatprep.subr.mxu0 0.0
    %864 = vmatpush1.msra.mxu0 0.0
    %865 = vmatprep.subr.mxu0 0.0
    %866 = vmatpush1.msra.mxu0 0.0
    %867 = vmatprep.subr.mxu0 0.0
    %868 = vmatpush1.msra.mxu0 0.0
    %869 = vmatprep.subr.mxu0 0.0
    %870 = vmatpush1.msra.mxu0 0.0
    %871 = vmatprep.subr.mxu0 0.0
    %872 = vmatpush1.msra.mxu0 0.0
    %873 = vmatprep.subr.mxu0 0.0
    %874 = vmatpush1.msra.mxu0 0.0
    %875 = vmatprep.subr.mxu0 0.0
    %876 = vmatpush1.msra.mxu0 0.0
    %877 = vmatprep.subr.mxu0 0.0
    %878 = vmatpush1.msra.mxu0 0.0
    %879 = vmatprep.subr.mxu0 0.0
    %880 = vmatpush1.msra.mxu0 0.0
    %881 = vmatprep.subr.mxu0 0.0
    %882 = vmatpush1.msra.mxu0 0.0
    %883 = vmatprep.subr.mxu0 0.0
    %884 = vmatpush1.msra.mxu0 0.0
    %885 = vmatprep.subr.mxu0 0.0
    %886 = vmatpush1.msra.mxu0 %v215
    %887 = vmatprep.subr.mxu0 0.0
    %888 = vmatpush1.msra.mxu0 %v214
    %889 = vmatprep.subr.mxu0 0.0
    %890 = vmatpush1.msra.mxu0 %v213
    %891 = vmatprep.subr.mxu0 0.0
    %892 = vmatpush1.msra.mxu0 %v212
    %893 = vmatprep.subr.mxu0 0.0
    %894 = vmatpush2.msra.mxu0 0.0
    %895 = vmatprep.subr.mxu0 0.0
    %896 = vmatpush2.msra.mxu0 0.0
    %897 = vmatprep.subr.mxu0 0.0
    %898 = vmatpush2.msra.mxu0 0.0
    %899 = vmatprep.subr.mxu0 0.0
    %900 = vmatpush2.msra.mxu0 0.0
    %901 = vmatprep.subr.mxu0 0.0
    %902 = vmatpush2.msra.mxu0 0.0
    %903 = vmatprep.subr.mxu0 0.0
    %904 = vmatpush2.msra.mxu0 0.0
    %905 = vmatprep.subr.mxu0 0.0
    %906 = vmatpush2.msra.mxu0 0.0
    %907 = vmatprep.subr.mxu0 0.0
    %908 = vmatpush2.msra.mxu0 0.0
    %909 = vmatprep.subr.mxu0 0.0
    %910 = vmatpush2.msra.mxu0 0.0
    %911 = vmatprep.subr.mxu0 0.0
    %912 = vmatpush2.msra.mxu0 0.0
    %913 = vmatprep.subr.mxu0 0.0
    %914 = vmatpush2.msra.mxu0 0.0
    %915 = vmatprep.subr.mxu0 0.0
    %916 = vmatpush2.msra.mxu0 0.0
    %917 = vmatprep.subr.mxu0 0.0
    %918 = vmatpush2.msra.mxu0 0.0
    %919 = vmatprep.subr.mxu0 0.0
    %920 = vmatpush2.msra.mxu0 0.0
    %921 = vmatprep.subr.mxu0 0.0
    %922 = vmatpush2.msra.mxu0 0.0
    %923 = vmatprep.subr.mxu0 0.0
    %924 = vmatpush2.msra.mxu0 0.0
    %925 = vmatprep.mubr.f32.mxu0 0.0
    %926 = vmatmul.mubr.f32.gmra.mxu0 %v859
    %v927 = vpop.f32.mrf.mxu0
    %v928 = vadd.f32 0.0, %v927
    %v929 = vpop.f32.mrf.mxu0
    %930 = vdwg.mxu0
    %v931 = vadd.f32 %v209, %v928
    %v932 = vxor.u32 %v931, 2147483648
    %v933 = vmul.f32 %v932, 1.442695
    %v934 = vpow.pop %v933
    %v935 = vadd.f32 %v934, 1.0
    %v936 = vrcp.pop %v935
    %v937 = vmul.f32 1.0, %v936
    %v938 = vmul.f32 %v937, 2.0
    %v939 = vsub.f32 %v938, 1.0
    %v940 = vmul.f32 %v937, %v843
    %942 = vrot.lane.b32.xlu0 %v939, 64
    %v943 = vpop.permute.xlu0 %942
    %v945 = vmul.f32 %v937, %v943
    %947 = vrot.lane.b32.xlu0 %v945, 32
    %v948 = vpop.permute.xlu0 %947
    %v950 = vadd.f32 %v940, %v948
    %v951 = vtanh.pop %v950
    %953 = vrot.lane.b32.xlu0 %v951, 64
    %v954 = vpop.permute.xlu0 %953
    %v956 = vmul.f32 %v937, %v954
    %v957 = vmax.f32 %v956, 0.0
    %959 = vrot.lane.b32.xlu0 %v957, 96
    %v960 = vpop.permute.xlu0 %959
    %962 = vst.msk [vmem:[#allocation2 + $0x8] sm:$0xff] %vm536, %v960
    %v963 = vld [vmem:[#allocation2] sm:$0xff]
    %v964 = vld [vmem:[#allocation2 + $0x8] sm:$0xff]
    %v965 = vld [vmem:[#allocation7] sm:$0xff]
    %v966 = vld [vmem:[#allocation7 + $0x8] sm:$0xff]
    %v967 = vld [vmem:[#allocation7 + $0x10] sm:$0xff]
    %v968 = vld [vmem:[#allocation7 + $0x18] sm:$0xff]
    %v969 = vld [vmem:[#allocation7 + $0x20] sm:$0xff]
    %v970 = vld [vmem:[#allocation7 + $0x28] sm:$0xff]
    %v971 = vld [vmem:[#allocation7 + $0x30] sm:$0xff]
    %v972 = vld [vmem:[#allocation7 + $0x38] sm:$0xff]
    %v973 = vld [vmem:[#allocation7 + $0x40] sm:$0xff]
    %v974 = vld [vmem:[#allocation7 + $0x48] sm:$0xff]
    %v975 = vld [vmem:[#allocation7 + $0x50] sm:$0xff]
    %v976 = vld [vmem:[#allocation7 + $0x58] sm:$0xff]
    %v977 = vld [vmem:[#allocation7 + $0x60] sm:$0xff]
    %v978 = vld [vmem:[#allocation7 + $0x68] sm:$0xff]
    %v979 = vld [vmem:[#allocation7 + $0x70] sm:$0xff]
    %v980 = vld [vmem:[#allocation7 + $0x78] sm:$0xff]
    %v981 = vld [vmem:[#allocation7 + $0x80] sm:$0xff]
    %v982 = vld [vmem:[#allocation7 + $0x88] sm:$0xff]
    %v983 = vld [vmem:[#allocation7 + $0x90] sm:$0xff]
    %v984 = vld [vmem:[#allocation7 + $0x98] sm:$0xff]
    %v985 = vld [vmem:[#allocation7 + $0xa0] sm:$0xff]
    %v986 = vld [vmem:[#allocation7 + $0xa8] sm:$0xff]
    %v987 = vld [vmem:[#allocation7 + $0xb0] sm:$0xff]
    %v988 = vld [vmem:[#allocation7 + $0xb8] sm:$0xff]
    %v989 = vld [vmem:[#allocation7 + $0xc0] sm:$0xff]
    %v990 = vld [vmem:[#allocation7 + $0xc8] sm:$0xff]
    %v991 = vld [vmem:[#allocation7 + $0xd0] sm:$0xff]
    %v992 = vld [vmem:[#allocation7 + $0xd8] sm:$0xff]
    %v993 = vld [vmem:[%s5] sm:$0x1]
    %v995 = vlaneseq
    %v996 = vshrl.u32 %v995, 7
    %v997 = vsub.s32 0, %v996
    %v998 = vrot.slane %v993, %v997
    %vm1000 = vcmask 785408
    %v1002 = vsel %vm1000, %v964, 0
    %1004 = vmatprep.subr.mxu0 0.0
    %1005 = vmatpush1.msra.mxu0 %v980
    %1006 = vmatprep.subr.mxu0 0.0
    %1007 = vmatpush1.msra.mxu0 %v979
    %1008 = vmatprep.subr.mxu0 0.0
    %1009 = vmatpush1.msra.mxu0 %v978
    %1010 = vmatprep.subr.mxu0 0.0
    %1011 = vmatpush1.msra.mxu0 %v977
    %1012 = vmatprep.subr.mxu0 0.0
    %1013 = vmatpush1.msra.mxu0 %v976
    %1014 = vmatprep.subr.mxu0 0.0
    %1015 = vmatpush1.msra.mxu0 %v975
    %1016 = vmatprep.subr.mxu0 0.0
    %1017 = vmatpush1.msra.mxu0 %v974
    %1018 = vmatprep.subr.mxu0 0.0
    %1019 = vmatpush1.msra.mxu0 %v973
    %1020 = vmatprep.subr.mxu0 0.0
    %1021 = vmatpush1.msra.mxu0 %v972
    %1022 = vmatprep.subr.mxu0 0.0
    %1023 = vmatpush1.msra.mxu0 %v971
    %1024 = vmatprep.subr.mxu0 0.0
    %1025 = vmatpush1.msra.mxu0 %v970
    %1026 = vmatprep.subr.mxu0 0.0
    %1027 = vmatpush1.msra.mxu0 %v969
    %1028 = vmatprep.subr.mxu0 0.0
    %1029 = vmatpush1.msra.mxu0 %v968
    %1030 = vmatprep.subr.mxu0 0.0
    %1031 = vmatpush1.msra.mxu0 %v967
    %1032 = vmatprep.subr.mxu0 0.0
    %1033 = vmatpush1.msra.mxu0 %v966
    %1034 = vmatprep.subr.mxu0 0.0
    %1035 = vmatpush1.msra.mxu0 %v965
    %1036 = vmatprep.subr.mxu0 0.0
    %1037 = vmatpush2.msra.mxu0 0.0
    %1038 = vmatprep.subr.mxu0 0.0
    %1039 = vmatpush2.msra.mxu0 0.0
    %1040 = vmatprep.subr.mxu0 0.0
    %1041 = vmatpush2.msra.mxu0 0.0
    %1042 = vmatprep.subr.mxu0 0.0
    %1043 = vmatpush2.msra.mxu0 0.0
    %1044 = vmatprep.subr.mxu0 0.0
    %1045 = vmatpush2.msra.mxu0 %v992
    %1046 = vmatprep.subr.mxu0 0.0
    %1047 = vmatpush2.msra.mxu0 %v991
    %1048 = vmatprep.subr.mxu0 0.0
    %1049 = vmatpush2.msra.mxu0 %v990
    %1050 = vmatprep.subr.mxu0 0.0
    %1051 = vmatpush2.msra.mxu0 %v989
    %1052 = vmatprep.subr.mxu0 0.0
    %1053 = vmatpush2.msra.mxu0 %v988
    %1054 = vmatprep.subr.mxu0 0.0
    %1055 = vmatpush2.msra.mxu0 %v987
    %1056 = vmatprep.subr.mxu0 0.0
    %1057 = vmatpush2.msra.mxu0 %v986
    %1058 = vmatprep.subr.mxu0 0.0
    %1059 = vmatpush2.msra.mxu0 %v985
    %1060 = vmatprep.subr.mxu0 0.0
    %1061 = vmatpush2.msra.mxu0 %v984
    %1062 = vmatprep.subr.mxu0 0.0
    %1063 = vmatpush2.msra.mxu0 %v983
    %1064 = vmatprep.subr.mxu0 0.0
    %1065 = vmatpush2.msra.mxu0 %v982
    %1066 = vmatprep.subr.mxu0 0.0
    %1067 = vmatpush2.msra.mxu0 %v981
    %1068 = vmatprep.mubr.f32.mxu0 %v1002
    %1069 = vmatmul.mubr.f32.gmra.mxu0 %v963
    %v1070 = vpop.f32.mrf.mxu0
    %v1071 = vadd.f32 %v998, %v1070
    %v1072 = vpop.f32.mrf.mxu0
    %1073 = vdwg.mxu0
    %v1074 = vld [vmem:[%s6] sm:$0xff]
    %v1075 = vld [vmem:[%s6 + $0x8] sm:$0xff]
    %v1076 = vld [vmem:[%s6 + $0x10] sm:$0xff]
    %v1077 = vld [vmem:[%s6 + $0x18] sm:$0xff]
    %1078 = vmatprep.subr.mxu0 0.0
    %1079 = vmatpush1.msra.mxu0 0.0
    %1080 = vmatprep.subr.mxu0 0.0
    %1081 = vmatpush1.msra.mxu0 0.0
    %1082 = vmatprep.subr.mxu0 0.0
    %1083 = vmatpush1.msra.mxu0 0.0
    %1084 = vmatprep.subr.mxu0 0.0
    %1085 = vmatpush1.msra.mxu0 0.0
    %1086 = vmatprep.subr.mxu0 0.0
    %1087 = vmatpush1.msra.mxu0 0.0
    %1088 = vmatprep.subr.mxu0 0.0
    %1089 = vmatpush1.msra.mxu0 0.0
    %1090 = vmatprep.subr.mxu0 0.0
    %1091 = vmatpush1.msra.mxu0 0.0
    %1092 = vmatprep.subr.mxu0 0.0
    %1093 = vmatpush1.msra.mxu0 0.0
    %1094 = vmatprep.subr.mxu0 0.0
    %1095 = vmatpush1.msra.mxu0 0.0
    %1096 = vmatprep.subr.mxu0 0.0
    %1097 = vmatpush1.msra.mxu0 0.0
    %1098 = vmatprep.subr.mxu0 0.0
    %1099 = vmatpush1.msra.mxu0 0.0
    %1100 = vmatprep.subr.mxu0 0.0
    %1101 = vmatpush1.msra.mxu0 0.0
    %1102 = vmatprep.subr.mxu0 0.0
    %1103 = vmatpush1.msra.mxu0 %v1077
    %1104 = vmatprep.subr.mxu0 0.0
    %1105 = vmatpush1.msra.mxu0 %v1076
    %1106 = vmatprep.subr.mxu0 0.0
    %1107 = vmatpush1.msra.mxu0 %v1075
    %1108 = vmatprep.subr.mxu0 0.0
    %1109 = vmatpush1.msra.mxu0 %v1074
    %1110 = vmatprep.subr.mxu0 0.0
    %1111 = vmatpush2.msra.mxu0 0.0
    %1112 = vmatprep.subr.mxu0 0.0
    %1113 = vmatpush2.msra.mxu0 0.0
    %1114 = vmatprep.subr.mxu0 0.0
    %1115 = vmatpush2.msra.mxu0 0.0
    %1116 = vmatprep.subr.mxu0 0.0
    %1117 = vmatpush2.msra.mxu0 0.0
    %1118 = vmatprep.subr.mxu0 0.0
    %1119 = vmatpush2.msra.mxu0 0.0
    %1120 = vmatprep.subr.mxu0 0.0
    %1121 = vmatpush2.msra.mxu0 0.0
    %1122 = vmatprep.subr.mxu0 0.0
    %1123 = vmatpush2.msra.mxu0 0.0
    %1124 = vmatprep.subr.mxu0 0.0
    %1125 = vmatpush2.msra.mxu0 0.0
    %1126 = vmatprep.subr.mxu0 0.0
    %1127 = vmatpush2.msra.mxu0 0.0
    %1128 = vmatprep.subr.mxu0 0.0
    %1129 = vmatpush2.msra.mxu0 0.0
    %1130 = vmatprep.subr.mxu0 0.0
    %1131 = vmatpush2.msra.mxu0 0.0
    %1132 = vmatprep.subr.mxu0 0.0
    %1133 = vmatpush2.msra.mxu0 0.0
    %1134 = vmatprep.subr.mxu0 0.0
    %1135 = vmatpush2.msra.mxu0 0.0
    %1136 = vmatprep.subr.mxu0 0.0
    %1137 = vmatpush2.msra.mxu0 0.0
    %1138 = vmatprep.subr.mxu0 0.0
    %1139 = vmatpush2.msra.mxu0 0.0
    %1140 = vmatprep.subr.mxu0 0.0
    %1141 = vmatpush2.msra.mxu0 0.0
    %1142 = vmatprep.mubr.f32.mxu0 0.0
    %1143 = vmatmul.mubr.f32.gmra.mxu0 %v218
    %v1144 = vpop.f32.mrf.mxu0
    %v1145 = vadd.f32 0.0, %v1144
    %v1146 = vpop.f32.mrf.mxu0
    %1147 = vdwg.mxu0
    %v1148 = vadd.f32 %v1071, %v1145
    %v1149 = vxor.u32 %v1148, 2147483648
    %v1150 = vmul.f32 %v1149, 1.442695
    %v1151 = vpow.pop %v1150
    %v1152 = vadd.f32 %v1151, 1.0
    %v1153 = vrcp.pop %v1152
    %v1154 = vmul.f32 1.0, %v1153
    %v1155 = vmul.f32 %v1154, 2.0
    %v1156 = vsub.f32 %v1155, 1.0
    %v1157 = vmul.f32 %v1154, 0.0
    %1159 = vrot.lane.b32.xlu0 %v1156, 64
    %v1160 = vpop.permute.xlu0 %1159
    %v1162 = vmul.f32 %v1154, %v1160
    %1164 = vrot.lane.b32.xlu0 %v1162, 32
    %v1165 = vpop.permute.xlu0 %1164
    %v1167 = vadd.f32 %v1157, %v1165
    %v1168 = vtanh.pop %v1167
    %1170 = vrot.lane.b32.xlu0 %v1168, 64
    %v1171 = vpop.permute.xlu0 %1170
    %v1173 = vmul.f32 %v1154, %v1171
    %v1174 = vmax.f32 %v1173, 0.0
    %1176 = vrot.lane.b32.xlu0 %v1174, 32
    %v1177 = vpop.permute.xlu0 %1176
    %1179 = vst.msk [vmem:[#allocation3] sm:$0xff] %vm216, %v1177
    %1181 = vrot.lane.b32.xlu0 %v1173, 32
    %v1182 = vpop.permute.xlu0 %1181
    %v1183 = vsel %vm216, %v1182, 0
    %1185 = vmatprep.subr.mxu0 0.0
    %1186 = vmatpush1.msra.mxu0 0.0
    %1187 = vmatprep.subr.mxu0 0.0
    %1188 = vmatpush1.msra.mxu0 0.0
    %1189 = vmatprep.subr.mxu0 0.0
    %1190 = vmatpush1.msra.mxu0 0.0
    %1191 = vmatprep.subr.mxu0 0.0
    %1192 = vmatpush1.msra.mxu0 0.0
    %1193 = vmatprep.subr.mxu0 0.0
    %1194 = vmatpush1.msra.mxu0 0.0
    %1195 = vmatprep.subr.mxu0 0.0
    %1196 = vmatpush1.msra.mxu0 0.0
    %1197 = vmatprep.subr.mxu0 0.0
    %1198 = vmatpush1.msra.mxu0 0.0
    %1199 = vmatprep.subr.mxu0 0.0
    %1200 = vmatpush1.msra.mxu0 0.0
    %1201 = vmatprep.subr.mxu0 0.0
    %1202 = vmatpush1.msra.mxu0 0.0
    %1203 = vmatprep.subr.mxu0 0.0
    %1204 = vmatpush1.msra.mxu0 0.0
    %1205 = vmatprep.subr.mxu0 0.0
    %1206 = vmatpush1.msra.mxu0 0.0
    %1207 = vmatprep.subr.mxu0 0.0
    %1208 = vmatpush1.msra.mxu0 0.0
    %1209 = vmatprep.subr.mxu0 0.0
    %1210 = vmatpush1.msra.mxu0 %v1077
    %1211 = vmatprep.subr.mxu0 0.0
    %1212 = vmatpush1.msra.mxu0 %v1076
    %1213 = vmatprep.subr.mxu0 0.0
    %1214 = vmatpush1.msra.mxu0 %v1075
    %1215 = vmatprep.subr.mxu0 0.0
    %1216 = vmatpush1.msra.mxu0 %v1074
    %1217 = vmatprep.subr.mxu0 0.0
    %1218 = vmatpush2.msra.mxu0 0.0
    %1219 = vmatprep.subr.mxu0 0.0
    %1220 = vmatpush2.msra.mxu0 0.0
    %1221 = vmatprep.subr.mxu0 0.0
    %1222 = vmatpush2.msra.mxu0 0.0
    %1223 = vmatprep.subr.mxu0 0.0
    %1224 = vmatpush2.msra.mxu0 0.0
    %1225 = vmatprep.subr.mxu0 0.0
    %1226 = vmatpush2.msra.mxu0 0.0
    %1227 = vmatprep.subr.mxu0 0.0
    %1228 = vmatpush2.msra.mxu0 0.0
    %1229 = vmatprep.subr.mxu0 0.0
    %1230 = vmatpush2.msra.mxu0 0.0
    %1231 = vmatprep.subr.mxu0 0.0
    %1232 = vmatpush2.msra.mxu0 0.0
    %1233 = vmatprep.subr.mxu0 0.0
    %1234 = vmatpush2.msra.mxu0 0.0
    %1235 = vmatprep.subr.mxu0 0.0
    %1236 = vmatpush2.msra.mxu0 0.0
    %1237 = vmatprep.subr.mxu0 0.0
    %1238 = vmatpush2.msra.mxu0 0.0
    %1239 = vmatprep.subr.mxu0 0.0
    %1240 = vmatpush2.msra.mxu0 0.0
    %1241 = vmatprep.subr.mxu0 0.0
    %1242 = vmatpush2.msra.mxu0 0.0
    %1243 = vmatprep.subr.mxu0 0.0
    %1244 = vmatpush2.msra.mxu0 0.0
    %1245 = vmatprep.subr.mxu0 0.0
    %1246 = vmatpush2.msra.mxu0 0.0
    %1247 = vmatprep.subr.mxu0 0.0
    %1248 = vmatpush2.msra.mxu0 0.0
    %1249 = vmatprep.mubr.f32.mxu0 0.0
    %1250 = vmatmul.mubr.f32.gmra.mxu0 %v1183
    %v1251 = vpop.f32.mrf.mxu0
    %v1252 = vadd.f32 0.0, %v1251
    %v1253 = vpop.f32.mrf.mxu0
    %1254 = vdwg.mxu0
    %v1255 = vadd.f32 %v1071, %v1252
    %v1256 = vxor.u32 %v1255, 2147483648
    %v1257 = vmul.f32 %v1256, 1.442695
    %v1258 = vpow.pop %v1257
    %v1259 = vadd.f32 %v1258, 1.0
    %v1260 = vrcp.pop %v1259
    %v1261 = vmul.f32 1.0, %v1260
    %v1262 = vmul.f32 %v1261, 2.0
    %v1263 = vsub.f32 %v1262, 1.0
    %v1264 = vmul.f32 %v1261, %v1167
    %1266 = vrot.lane.b32.xlu0 %v1263, 64
    %v1267 = vpop.permute.xlu0 %1266
    %v1269 = vmul.f32 %v1261, %v1267
    %1271 = vrot.lane.b32.xlu0 %v1269, 32
    %v1272 = vpop.permute.xlu0 %1271
    %v1274 = vadd.f32 %v1264, %v1272
    %v1275 = vtanh.pop %v1274
    %1277 = vrot.lane.b32.xlu0 %v1275, 64
    %v1278 = vpop.permute.xlu0 %1277
    %v1280 = vmul.f32 %v1261, %v1278
    %v1281 = vmax.f32 %v1280, 0.0
    %1283 = vrot.lane.b32.xlu0 %v1281, 64
    %v1284 = vpop.permute.xlu0 %1283
    %1286 = vst.msk [vmem:[#allocation3] sm:$0xff] %vm428, %v1284
    %1288 = vrot.lane.b32.xlu0 %v1280, 32
    %v1289 = vpop.permute.xlu0 %1288
    %v1290 = vsel %vm216, %v1289, 0
    %1292 = vmatprep.subr.mxu0 0.0
    %1293 = vmatpush1.msra.mxu0 0.0
    %1294 = vmatprep.subr.mxu0 0.0
    %1295 = vmatpush1.msra.mxu0 0.0
    %1296 = vmatprep.subr.mxu0 0.0
    %1297 = vmatpush1.msra.mxu0 0.0
    %1298 = vmatprep.subr.mxu0 0.0
    %1299 = vmatpush1.msra.mxu0 0.0
    %1300 = vmatprep.subr.mxu0 0.0
    %1301 = vmatpush1.msra.mxu0 0.0
    %1302 = vmatprep.subr.mxu0 0.0
    %1303 = vmatpush1.msra.mxu0 0.0
    %1304 = vmatprep.subr.mxu0 0.0
    %1305 = vmatpush1.msra.mxu0 0.0
    %1306 = vmatprep.subr.mxu0 0.0
    %1307 = vmatpush1.msra.mxu0 0.0
    %1308 = vmatprep.subr.mxu0 0.0
    %1309 = vmatpush1.msra.mxu0 0.0
    %1310 = vmatprep.subr.mxu0 0.0
    %1311 = vmatpush1.msra.mxu0 0.0
    %1312 = vmatprep.subr.mxu0 0.0
    %1313 = vmatpush1.msra.mxu0 0.0
    %1314 = vmatprep.subr.mxu0 0.0
    %1315 = vmatpush1.msra.mxu0 0.0
    %1316 = vmatprep.subr.mxu0 0.0
    %1317 = vmatpush1.msra.mxu0 %v1077
    %1318 = vmatprep.subr.mxu0 0.0
    %1319 = vmatpush1.msra.mxu0 %v1076
    %1320 = vmatprep.subr.mxu0 0.0
    %1321 = vmatpush1.msra.mxu0 %v1075
    %1322 = vmatprep.subr.mxu0 0.0
    %1323 = vmatpush1.msra.mxu0 %v1074
    %1324 = vmatprep.subr.mxu0 0.0
    %1325 = vmatpush2.msra.mxu0 0.0
    %1326 = vmatprep.subr.mxu0 0.0
    %1327 = vmatpush2.msra.mxu0 0.0
    %1328 = vmatprep.subr.mxu0 0.0
    %1329 = vmatpush2.msra.mxu0 0.0
    %1330 = vmatprep.subr.mxu0 0.0
    %1331 = vmatpush2.msra.mxu0 0.0
    %1332 = vmatprep.subr.mxu0 0.0
    %1333 = vmatpush2.msra.mxu0 0.0
    %1334 = vmatprep.subr.mxu0 0.0
    %1335 = vmatpush2.msra.mxu0 0.0
    %1336 = vmatprep.subr.mxu0 0.0
    %1337 = vmatpush2.msra.mxu0 0.0
    %1338 = vmatprep.subr.mxu0 0.0
    %1339 = vmatpush2.msra.mxu0 0.0
    %1340 = vmatprep.subr.mxu0 0.0
    %1341 = vmatpush2.msra.mxu0 0.0
    %1342 = vmatprep.subr.mxu0 0.0
    %1343 = vmatpush2.msra.mxu0 0.0
    %1344 = vmatprep.subr.mxu0 0.0
    %1345 = vmatpush2.msra.mxu0 0.0
    %1346 = vmatprep.subr.mxu0 0.0
    %1347 = vmatpush2.msra.mxu0 0.0
    %1348 = vmatprep.subr.mxu0 0.0
    %1349 = vmatpush2.msra.mxu0 0.0
    %1350 = vmatprep.subr.mxu0 0.0
    %1351 = vmatpush2.msra.mxu0 0.0
    %1352 = vmatprep.subr.mxu0 0.0
    %1353 = vmatpush2.msra.mxu0 0.0
    %1354 = vmatprep.subr.mxu0 0.0
    %1355 = vmatpush2.msra.mxu0 0.0
    %1356 = vmatprep.mubr.f32.mxu0 0.0
    %1357 = vmatmul.mubr.f32.gmra.mxu0 %v1290
    %v1358 = vpop.f32.mrf.mxu0
    %v1359 = vadd.f32 0.0, %v1358
    %v1360 = vpop.f32.mrf.mxu0
    %1361 = vdwg.mxu0
    %v1362 = vadd.f32 %v1071, %v1359
    %v1363 = vxor.u32 %v1362, 2147483648
    %v1364 = vmul.f32 %v1363, 1.442695
    %v1365 = vpow.pop %v1364
    %v1366 = vadd.f32 %v1365, 1.0
    %v1367 = vrcp.pop %v1366
    %v1368 = vmul.f32 1.0, %v1367
    %v1369 = vmul.f32 %v1368, 2.0
    %v1370 = vsub.f32 %v1369, 1.0
    %v1371 = vmul.f32 %v1368, %v1274
    %1373 = vrot.lane.b32.xlu0 %v1370, 64
    %v1374 = vpop.permute.xlu0 %1373
    %v1376 = vmul.f32 %v1368, %v1374
    %1378 = vrot.lane.b32.xlu0 %v1376, 32
    %v1379 = vpop.permute.xlu0 %1378
    %v1381 = vadd.f32 %v1371, %v1379
    %v1382 = vtanh.pop %v1381
    %1384 = vrot.lane.b32.xlu0 %v1382, 64
    %v1385 = vpop.permute.xlu0 %1384
    %v1387 = vmul.f32 %v1368, %v1385
    %v1388 = vmax.f32 %v1387, 0.0
    %1390 = vrot.lane.b32.xlu0 %v1388, 96
    %v1391 = vpop.permute.xlu0 %1390
    %1393 = vst.msk [vmem:[#allocation3] sm:$0xff] %vm536, %v1391
    %1395 = vrot.lane.b32.xlu0 %v1387, 32
    %v1396 = vpop.permute.xlu0 %1395
    %v1397 = vsel %vm216, %v1396, 0
    %1399 = vmatprep.subr.mxu0 0.0
    %1400 = vmatpush1.msra.mxu0 0.0
    %1401 = vmatprep.subr.mxu0 0.0
    %1402 = vmatpush1.msra.mxu0 0.0
    %1403 = vmatprep.subr.mxu0 0.0
    %1404 = vmatpush1.msra.mxu0 0.0
    %1405 = vmatprep.subr.mxu0 0.0
    %1406 = vmatpush1.msra.mxu0 0.0
    %1407 = vmatprep.subr.mxu0 0.0
    %1408 = vmatpush1.msra.mxu0 0.0
    %1409 = vmatprep.subr.mxu0 0.0
    %1410 = vmatpush1.msra.mxu0 0.0
    %1411 = vmatprep.subr.mxu0 0.0
    %1412 = vmatpush1.msra.mxu0 0.0
    %1413 = vmatprep.subr.mxu0 0.0
    %1414 = vmatpush1.msra.mxu0 0.0
    %1415 = vmatprep.subr.mxu0 0.0
    %1416 = vmatpush1.msra.mxu0 0.0
    %1417 = vmatprep.subr.mxu0 0.0
    %1418 = vmatpush1.msra.mxu0 0.0
    %1419 = vmatprep.subr.mxu0 0.0
    %1420 = vmatpush1.msra.mxu0 0.0
    %1421 = vmatprep.subr.mxu0 0.0
    %1422 = vmatpush1.msra.mxu0 0.0
    %1423 = vmatprep.subr.mxu0 0.0
    %1424 = vmatpush1.msra.mxu0 %v1077
    %1425 = vmatprep.subr.mxu0 0.0
    %1426 = vmatpush1.msra.mxu0 %v1076
    %1427 = vmatprep.subr.mxu0 0.0
    %1428 = vmatpush1.msra.mxu0 %v1075
    %1429 = vmatprep.subr.mxu0 0.0
    %1430 = vmatpush1.msra.mxu0 %v1074
    %1431 = vmatprep.subr.mxu0 0.0
    %1432 = vmatpush2.msra.mxu0 0.0
    %1433 = vmatprep.subr.mxu0 0.0
    %1434 = vmatpush2.msra.mxu0 0.0
    %1435 = vmatprep.subr.mxu0 0.0
    %1436 = vmatpush2.msra.mxu0 0.0
    %1437 = vmatprep.subr.mxu0 0.0
    %1438 = vmatpush2.msra.mxu0 0.0
    %1439 = vmatprep.subr.mxu0 0.0
    %1440 = vmatpush2.msra.mxu0 0.0
    %1441 = vmatprep.subr.mxu0 0.0
    %1442 = vmatpush2.msra.mxu0 0.0
    %1443 = vmatprep.subr.mxu0 0.0
    %1444 = vmatpush2.msra.mxu0 0.0
    %1445 = vmatprep.subr.mxu0 0.0
    %1446 = vmatpush2.msra.mxu0 0.0
    %1447 = vmatprep.subr.mxu0 0.0
    %1448 = vmatpush2.msra.mxu0 0.0
    %1449 = vmatprep.subr.mxu0 0.0
    %1450 = vmatpush2.msra.mxu0 0.0
    %1451 = vmatprep.subr.mxu0 0.0
    %1452 = vmatpush2.msra.mxu0 0.0
    %1453 = vmatprep.subr.mxu0 0.0
    %1454 = vmatpush2.msra.mxu0 0.0
    %1455 = vmatprep.subr.mxu0 0.0
    %1456 = vmatpush2.msra.mxu0 0.0
    %1457 = vmatprep.subr.mxu0 0.0
    %1458 = vmatpush2.msra.mxu0 0.0
    %1459 = vmatprep.subr.mxu0 0.0
    %1460 = vmatpush2.msra.mxu0 0.0
    %1461 = vmatprep.subr.mxu0 0.0
    %1462 = vmatpush2.msra.mxu0 0.0
    %1463 = vmatprep.mubr.f32.mxu0 0.0
    %1464 = vmatmul.mubr.f32.gmra.mxu0 %v1397
    %v1465 = vpop.f32.mrf.mxu0
    %v1466 = vadd.f32 0.0, %v1465
    %v1467 = vpop.f32.mrf.mxu0
    %1468 = vdwg.mxu0
    %v1469 = vadd.f32 %v1071, %v1466
    %v1470 = vxor.u32 %v1469, 2147483648
    %v1471 = vmul.f32 %v1470, 1.442695
    %v1472 = vpow.pop %v1471
    %v1473 = vadd.f32 %v1472, 1.0
    %v1474 = vrcp.pop %v1473
    %v1475 = vmul.f32 1.0, %v1474
    %v1476 = vmul.f32 %v1475, 2.0
    %v1477 = vsub.f32 %v1476, 1.0
    %v1478 = vmul.f32 %v1475, %v1381
    %1480 = vrot.lane.b32.xlu0 %v1477, 64
    %v1481 = vpop.permute.xlu0 %1480
    %v1483 = vmul.f32 %v1475, %v1481
    %1485 = vrot.lane.b32.xlu0 %v1483, 32
    %v1486 = vpop.permute.xlu0 %1485
    %v1488 = vadd.f32 %v1478, %v1486
    %v1489 = vtanh.pop %v1488
    %1491 = vrot.lane.b32.xlu0 %v1489, 64
    %v1492 = vpop.permute.xlu0 %1491
    %v1494 = vmul.f32 %v1475, %v1492
    %v1495 = vmax.f32 %v1494, 0.0
    %1496 = vst.msk [vmem:[#allocation3] sm:$0xff] %vm640, %v1495
    %1498 = vrot.lane.b32.xlu0 %v1494, 32
    %v1499 = vpop.permute.xlu0 %1498
    %v1500 = vsel %vm216, %v1499, 0
    %1502 = vmatprep.subr.mxu0 0.0
    %1503 = vmatpush1.msra.mxu0 0.0
    %1504 = vmatprep.subr.mxu0 0.0
    %1505 = vmatpush1.msra.mxu0 0.0
    %1506 = vmatprep.subr.mxu0 0.0
    %1507 = vmatpush1.msra.mxu0 0.0
    %1508 = vmatprep.subr.mxu0 0.0
    %1509 = vmatpush1.msra.mxu0 0.0
    %1510 = vmatprep.subr.mxu0 0.0
    %1511 = vmatpush1.msra.mxu0 0.0
    %1512 = vmatprep.subr.mxu0 0.0
    %1513 = vmatpush1.msra.mxu0 0.0
    %1514 = vmatprep.subr.mxu0 0.0
    %1515 = vmatpush1.msra.mxu0 0.0
    %1516 = vmatprep.subr.mxu0 0.0
    %1517 = vmatpush1.msra.mxu0 0.0
    %1518 = vmatprep.subr.mxu0 0.0
    %1519 = vmatpush1.msra.mxu0 0.0
    %1520 = vmatprep.subr.mxu0 0.0
    %1521 = vmatpush1.msra.mxu0 0.0
    %1522 = vmatprep.subr.mxu0 0.0
    %1523 = vmatpush1.msra.mxu0 0.0
    %1524 = vmatprep.subr.mxu0 0.0
    %1525 = vmatpush1.msra.mxu0 0.0
    %1526 = vmatprep.subr.mxu0 0.0
    %1527 = vmatpush1.msra.mxu0 %v1077
    %1528 = vmatprep.subr.mxu0 0.0
    %1529 = vmatpush1.msra.mxu0 %v1076
    %1530 = vmatprep.subr.mxu0 0.0
    %1531 = vmatpush1.msra.mxu0 %v1075
    %1532 = vmatprep.subr.mxu0 0.0
    %1533 = vmatpush1.msra.mxu0 %v1074
    %1534 = vmatprep.subr.mxu0 0.0
    %1535 = vmatpush2.msra.mxu0 0.0
    %1536 = vmatprep.subr.mxu0 0.0
    %1537 = vmatpush2.msra.mxu0 0.0
    %1538 = vmatprep.subr.mxu0 0.0
    %1539 = vmatpush2.msra.mxu0 0.0
    %1540 = vmatprep.subr.mxu0 0.0
    %1541 = vmatpush2.msra.mxu0 0.0
    %1542 = vmatprep.subr.mxu0 0.0
    %1543 = vmatpush2.msra.mxu0 0.0
    %1544 = vmatprep.subr.mxu0 0.0
    %1545 = vmatpush2.msra.mxu0 0.0
    %1546 = vmatprep.subr.mxu0 0.0
    %1547 = vmatpush2.msra.mxu0 0.0
    %1548 = vmatprep.subr.mxu0 0.0
    %1549 = vmatpush2.msra.mxu0 0.0
    %1550 = vmatprep.subr.mxu0 0.0
    %1551 = vmatpush2.msra.mxu0 0.0
    %1552 = vmatprep.subr.mxu0 0.0
    %1553 = vmatpush2.msra.mxu0 0.0
    %1554 = vmatprep.subr.mxu0 0.0
    %1555 = vmatpush2.msra.mxu0 0.0
    %1556 = vmatprep.subr.mxu0 0.0
    %1557 = vmatpush2.msra.mxu0 0.0
    %1558 = vmatprep.subr.mxu0 0.0
    %1559 = vmatpush2.msra.mxu0 0.0
    %1560 = vmatprep.subr.mxu0 0.0
    %1561 = vmatpush2.msra.mxu0 0.0
    %1562 = vmatprep.subr.mxu0 0.0
    %1563 = vmatpush2.msra.mxu0 0.0
    %1564 = vmatprep.subr.mxu0 0.0
    %1565 = vmatpush2.msra.mxu0 0.0
    %1566 = vmatprep.mubr.f32.mxu0 0.0
    %1567 = vmatmul.mubr.f32.gmra.mxu0 %v1500
    %v1568 = vpop.f32.mrf.mxu0
    %v1569 = vadd.f32 0.0, %v1568
    %v1570 = vpop.f32.mrf.mxu0
    %1571 = vdwg.mxu0
    %v1572 = vadd.f32 %v1071, %v1569
    %v1573 = vxor.u32 %v1572, 2147483648
    %v1574 = vmul.f32 %v1573, 1.442695
    %v1575 = vpow.pop %v1574
    %v1576 = vadd.f32 %v1575, 1.0
    %v1577 = vrcp.pop %v1576
    %v1578 = vmul.f32 1.0, %v1577
    %v1579 = vmul.f32 %v1578, 2.0
    %v1580 = vsub.f32 %v1579, 1.0
    %v1581 = vmul.f32 %v1578, %v1488
    %1583 = vrot.lane.b32.xlu0 %v1580, 64
    %v1584 = vpop.permute.xlu0 %1583
    %v1586 = vmul.f32 %v1578, %v1584
    %1588 = vrot.lane.b32.xlu0 %v1586, 32
    %v1589 = vpop.permute.xlu0 %1588
    %v1591 = vadd.f32 %v1581, %v1589
    %v1592 = vtanh.pop %v1591
    %1594 = vrot.lane.b32.xlu0 %v1592, 64
    %v1595 = vpop.permute.xlu0 %1594
    %v1597 = vmul.f32 %v1578, %v1595
    %v1598 = vmax.f32 %v1597, 0.0
    %1600 = vrot.lane.b32.xlu0 %v1598, 32
    %v1601 = vpop.permute.xlu0 %1600
    %1603 = vst.msk [vmem:[#allocation3 + $0x8] sm:$0xff] %vm216, %v1601
    %1605 = vrot.lane.b32.xlu0 %v1597, 32
    %v1606 = vpop.permute.xlu0 %1605
    %v1607 = vsel %vm216, %v1606, 0
    %1609 = vmatprep.subr.mxu0 0.0
    %1610 = vmatpush1.msra.mxu0 0.0
    %1611 = vmatprep.subr.mxu0 0.0
    %1612 = vmatpush1.msra.mxu0 0.0
    %1613 = vmatprep.subr.mxu0 0.0
    %1614 = vmatpush1.msra.mxu0 0.0
    %1615 = vmatprep.subr.mxu0 0.0
    %1616 = vmatpush1.msra.mxu0 0.0
    %1617 = vmatprep.subr.mxu0 0.0
    %1618 = vmatpush1.msra.mxu0 0.0
    %1619 = vmatprep.subr.mxu0 0.0
    %1620 = vmatpush1.msra.mxu0 0.0
    %1621 = vmatprep.subr.mxu0 0.0
    %1622 = vmatpush1.msra.mxu0 0.0
    %1623 = vmatprep.subr.mxu0 0.0
    %1624 = vmatpush1.msra.mxu0 0.0
    %1625 = vmatprep.subr.mxu0 0.0
    %1626 = vmatpush1.msra.mxu0 0.0
    %1627 = vmatprep.subr.mxu0 0.0
    %1628 = vmatpush1.msra.mxu0 0.0
    %1629 = vmatprep.subr.mxu0 0.0
    %1630 = vmatpush1.msra.mxu0 0.0
    %1631 = vmatprep.subr.mxu0 0.0
    %1632 = vmatpush1.msra.mxu0 0.0
    %1633 = vmatprep.subr.mxu0 0.0
    %1634 = vmatpush1.msra.mxu0 %v1077
    %1635 = vmatprep.subr.mxu0 0.0
    %1636 = vmatpush1.msra.mxu0 %v1076
    %1637 = vmatprep.subr.mxu0 0.0
    %1638 = vmatpush1.msra.mxu0 %v1075
    %1639 = vmatprep.subr.mxu0 0.0
    %1640 = vmatpush1.msra.mxu0 %v1074
    %1641 = vmatprep.subr.mxu0 0.0
    %1642 = vmatpush2.msra.mxu0 0.0
    %1643 = vmatprep.subr.mxu0 0.0
    %1644 = vmatpush2.msra.mxu0 0.0
    %1645 = vmatprep.subr.mxu0 0.0
    %1646 = vmatpush2.msra.mxu0 0.0
    %1647 = vmatprep.subr.mxu0 0.0
    %1648 = vmatpush2.msra.mxu0 0.0
    %1649 = vmatprep.subr.mxu0 0.0
    %1650 = vmatpush2.msra.mxu0 0.0
    %1651 = vmatprep.subr.mxu0 0.0
    %1652 = vmatpush2.msra.mxu0 0.0
    %1653 = vmatprep.subr.mxu0 0.0
    %1654 = vmatpush2.msra.mxu0 0.0
    %1655 = vmatprep.subr.mxu0 0.0
    %1656 = vmatpush2.msra.mxu0 0.0
    %1657 = vmatprep.subr.mxu0 0.0
    %1658 = vmatpush2.msra.mxu0 0.0
    %1659 = vmatprep.subr.mxu0 0.0
    %1660 = vmatpush2.msra.mxu0 0.0
    %1661 = vmatprep.subr.mxu0 0.0
    %1662 = vmatpush2.msra.mxu0 0.0
    %1663 = vmatprep.subr.mxu0 0.0
    %1664 = vmatpush2.msra.mxu0 0.0
    %1665 = vmatprep.subr.mxu0 0.0
    %1666 = vmatpush2.msra.mxu0 0.0
    %1667 = vmatprep.subr.mxu0 0.0
    %1668 = vmatpush2.msra.mxu0 0.0
    %1669 = vmatprep.subr.mxu0 0.0
    %1670 = vmatpush2.msra.mxu0 0.0
    %1671 = vmatprep.subr.mxu0 0.0
    %1672 = vmatpush2.msra.mxu0 0.0
    %1673 = vmatprep.mubr.f32.mxu0 0.0
    %1674 = vmatmul.mubr.f32.gmra.mxu0 %v1607
    %v1675 = vpop.f32.mrf.mxu0
    %v1676 = vadd.f32 0.0, %v1675
    %v1677 = vpop.f32.mrf.mxu0
    %1678 = vdwg.mxu0
    %v1679 = vadd.f32 %v1071, %v1676
    %v1680 = vxor.u32 %v1679, 2147483648
    %v1681 = vmul.f32 %v1680, 1.442695
    %v1682 = vpow.pop %v1681
    %v1683 = vadd.f32 %v1682, 1.0
    %v1684 = vrcp.pop %v1683
    %v1685 = vmul.f32 1.0, %v1684
    %v1686 = vmul.f32 %v1685, 2.0
    %v1687 = vsub.f32 %v1686, 1.0
    %v1688 = vmul.f32 %v1685, %v1591
    %1690 = vrot.lane.b32.xlu0 %v1687, 64
    %v1691 = vpop.permute.xlu0 %1690
    %v1693 = vmul.f32 %v1685, %v1691
    %1695 = vrot.lane.b32.xlu0 %v1693, 32
    %v1696 = vpop.permute.xlu0 %1695
    %v1698 = vadd.f32 %v1688, %v1696
    %v1699 = vtanh.pop %v1698
    %1701 = vrot.lane.b32.xlu0 %v1699, 64
    %v1702 = vpop.permute.xlu0 %1701
    %v1704 = vmul.f32 %v1685, %v1702
    %v1705 = vmax.f32 %v1704, 0.0
    %1707 = vrot.lane.b32.xlu0 %v1705, 64
    %v1708 = vpop.permute.xlu0 %1707
    %1710 = vst.msk [vmem:[#allocation3 + $0x8] sm:$0xff] %vm428, %v1708
    %1712 = vrot.lane.b32.xlu0 %v1704, 32
    %v1713 = vpop.permute.xlu0 %1712
    %v1714 = vsel %vm216, %v1713, 0
    %1716 = vmatprep.subr.mxu0 0.0
    %1717 = vmatpush1.msra.mxu0 0.0
    %1718 = vmatprep.subr.mxu0 0.0
    %1719 = vmatpush1.msra.mxu0 0.0
    %1720 = vmatprep.subr.mxu0 0.0
    %1721 = vmatpush1.msra.mxu0 0.0
    %1722 = vmatprep.subr.mxu0 0.0
    %1723 = vmatpush1.msra.mxu0 0.0
    %1724 = vmatprep.subr.mxu0 0.0
    %1725 = vmatpush1.msra.mxu0 0.0
    %1726 = vmatprep.subr.mxu0 0.0
    %1727 = vmatpush1.msra.mxu0 0.0
    %1728 = vmatprep.subr.mxu0 0.0
    %1729 = vmatpush1.msra.mxu0 0.0
    %1730 = vmatprep.subr.mxu0 0.0
    %1731 = vmatpush1.msra.mxu0 0.0
    %1732 = vmatprep.subr.mxu0 0.0
    %1733 = vmatpush1.msra.mxu0 0.0
    %1734 = vmatprep.subr.mxu0 0.0
    %1735 = vmatpush1.msra.mxu0 0.0
    %1736 = vmatprep.subr.mxu0 0.0
    %1737 = vmatpush1.msra.mxu0 0.0
    %1738 = vmatprep.subr.mxu0 0.0
    %1739 = vmatpush1.msra.mxu0 0.0
    %1740 = vmatprep.subr.mxu0 0.0
    %1741 = vmatpush1.msra.mxu0 %v1077
    %1742 = vmatprep.subr.mxu0 0.0
    %1743 = vmatpush1.msra.mxu0 %v1076
    %1744 = vmatprep.subr.mxu0 0.0
    %1745 = vmatpush1.msra.mxu0 %v1075
    %1746 = vmatprep.subr.mxu0 0.0
    %1747 = vmatpush1.msra.mxu0 %v1074
    %1748 = vmatprep.subr.mxu0 0.0
    %1749 = vmatpush2.msra.mxu0 0.0
    %1750 = vmatprep.subr.mxu0 0.0
    %1751 = vmatpush2.msra.mxu0 0.0
    %1752 = vmatprep.subr.mxu0 0.0
    %1753 = vmatpush2.msra.mxu0 0.0
    %1754 = vmatprep.subr.mxu0 0.0
    %1755 = vmatpush2.msra.mxu0 0.0
    %1756 = vmatprep.subr.mxu0 0.0
    %1757 = vmatpush2.msra.mxu0 0.0
    %1758 = vmatprep.subr.mxu0 0.0
    %1759 = vmatpush2.msra.mxu0 0.0
    %1760 = vmatprep.subr.mxu0 0.0
    %1761 = vmatpush2.msra.mxu0 0.0
    %1762 = vmatprep.subr.mxu0 0.0
    %1763 = vmatpush2.msra.mxu0 0.0
    %1764 = vmatprep.subr.mxu0 0.0
    %1765 = vmatpush2.msra.mxu0 0.0
    %1766 = vmatprep.subr.mxu0 0.0
    %1767 = vmatpush2.msra.mxu0 0.0
    %1768 = vmatprep.subr.mxu0 0.0
    %1769 = vmatpush2.msra.mxu0 0.0
    %1770 = vmatprep.subr.mxu0 0.0
    %1771 = vmatpush2.msra.mxu0 0.0
    %1772 = vmatprep.subr.mxu0 0.0
    %1773 = vmatpush2.msra.mxu0 0.0
    %1774 = vmatprep.subr.mxu0 0.0
    %1775 = vmatpush2.msra.mxu0 0.0
    %1776 = vmatprep.subr.mxu0 0.0
    %1777 = vmatpush2.msra.mxu0 0.0
    %1778 = vmatprep.subr.mxu0 0.0
    %1779 = vmatpush2.msra.mxu0 0.0
    %1780 = vmatprep.mubr.f32.mxu0 0.0
    %1781 = vmatmul.mubr.f32.gmra.mxu0 %v1714
    %v1782 = vpop.f32.mrf.mxu0
    %v1783 = vadd.f32 0.0, %v1782
    %v1784 = vpop.f32.mrf.mxu0
    %1785 = vdwg.mxu0
    %v1786 = vadd.f32 %v1071, %v1783
    %v1787 = vxor.u32 %v1786, 2147483648
    %v1788 = vmul.f32 %v1787, 1.442695
    %v1789 = vpow.pop %v1788
    %v1790 = vadd.f32 %v1789, 1.0
    %v1791 = vrcp.pop %v1790
    %v1792 = vmul.f32 1.0, %v1791
    %v1793 = vmul.f32 %v1792, 2.0
    %v1794 = vsub.f32 %v1793, 1.0
    %v1795 = vmul.f32 %v1792, %v1698
    %1797 = vrot.lane.b32.xlu0 %v1794, 64
    %v1798 = vpop.permute.xlu0 %1797
    %v1800 = vmul.f32 %v1792, %v1798
    %1802 = vrot.lane.b32.xlu0 %v1800, 32
    %v1803 = vpop.permute.xlu0 %1802
    %v1805 = vadd.f32 %v1795, %v1803
    %v1806 = vtanh.pop %v1805
    %1808 = vrot.lane.b32.xlu0 %v1806, 64
    %v1809 = vpop.permute.xlu0 %1808
    %v1811 = vmul.f32 %v1792, %v1809
    %v1812 = vmax.f32 %v1811, 0.0
    %1814 = vrot.lane.b32.xlu0 %v1812, 96
    %v1815 = vpop.permute.xlu0 %1814
    %1817 = vst.msk [vmem:[#allocation3 + $0x8] sm:$0xff] %vm536, %v1815
    %v1818 = vld [vmem:[#allocation3] sm:$0xff]
    %v1819 = vld [vmem:[#allocation3 + $0x8] sm:$0xff]
    %v1820 = vld [vmem:[#allocation9] sm:$0xff]
    %v1821 = vld [vmem:[#allocation9 + $0x8] sm:$0xff]
    %v1822 = vld [vmem:[#allocation9 + $0x10] sm:$0xff]
    %v1823 = vld [vmem:[#allocation9 + $0x18] sm:$0xff]
    %v1824 = vld [vmem:[#allocation9 + $0x20] sm:$0xff]
    %v1825 = vld [vmem:[#allocation9 + $0x28] sm:$0xff]
    %v1826 = vld [vmem:[#allocation9 + $0x30] sm:$0xff]
    %v1827 = vld [vmem:[#allocation9 + $0x38] sm:$0xff]
    %v1828 = vld [vmem:[#allocation9 + $0x40] sm:$0xff]
    %v1829 = vld [vmem:[#allocation9 + $0x48] sm:$0xff]
    %v1830 = vld [vmem:[#allocation9 + $0x50] sm:$0xff]
    %v1831 = vld [vmem:[#allocation9 + $0x58] sm:$0xff]
    %v1832 = vld [vmem:[#allocation9 + $0x60] sm:$0xff]
    %v1833 = vld [vmem:[#allocation9 + $0x68] sm:$0xff]
    %v1834 = vld [vmem:[#allocation9 + $0x70] sm:$0xff]
    %v1835 = vld [vmem:[#allocation9 + $0x78] sm:$0xff]
    %v1836 = vld [vmem:[#allocation9 + $0x80] sm:$0xff]
    %v1837 = vld [vmem:[#allocation9 + $0x88] sm:$0xff]
    %v1838 = vld [vmem:[#allocation9 + $0x90] sm:$0xff]
    %v1839 = vld [vmem:[#allocation9 + $0x98] sm:$0xff]
    %v1840 = vld [vmem:[#allocation9 + $0xa0] sm:$0xff]
    %v1841 = vld [vmem:[#allocation9 + $0xa8] sm:$0xff]
    %v1842 = vld [vmem:[#allocation9 + $0xb0] sm:$0xff]
    %v1843 = vld [vmem:[#allocation9 + $0xb8] sm:$0xff]
    %v1844 = vld [vmem:[#allocation9 + $0xc0] sm:$0xff]
    %v1845 = vld [vmem:[#allocation9 + $0xc8] sm:$0xff]
    %v1846 = vld [vmem:[#allocation9 + $0xd0] sm:$0xff]
    %v1847 = vld [vmem:[#allocation9 + $0xd8] sm:$0xff]
    %v1848 = vld [vmem:[%s8] sm:$0x1]
    %v1850 = vlaneseq
    %v1851 = vshrl.u32 %v1850, 7
    %v1852 = vsub.s32 0, %v1851
    %v1853 = vrot.slane %v1848, %v1852
    %v1856 = vsel %vm1000, %v1819, 0
    %1858 = vmatprep.subr.mxu0 0.0
    %1859 = vmatpush1.msra.mxu0 %v1835
    %1860 = vmatprep.subr.mxu0 0.0
    %1861 = vmatpush1.msra.mxu0 %v1834
    %1862 = vmatprep.subr.mxu0 0.0
    %1863 = vmatpush1.msra.mxu0 %v1833
    %1864 = vmatprep.subr.mxu0 0.0
    %1865 = vmatpush1.msra.mxu0 %v1832
    %1866 = vmatprep.subr.mxu0 0.0
    %1867 = vmatpush1.msra.mxu0 %v1831
    %1868 = vmatprep.subr.mxu0 0.0
    %1869 = vmatpush1.msra.mxu0 %v1830
    %1870 = vmatprep.subr.mxu0 0.0
    %1871 = vmatpush1.msra.mxu0 %v1829
    %1872 = vmatprep.subr.mxu0 0.0
    %1873 = vmatpush1.msra.mxu0 %v1828
    %1874 = vmatprep.subr.mxu0 0.0
    %1875 = vmatpush1.msra.mxu0 %v1827
    %1876 = vmatprep.subr.mxu0 0.0
    %1877 = vmatpush1.msra.mxu0 %v1826
    %1878 = vmatprep.subr.mxu0 0.0
    %1879 = vmatpush1.msra.mxu0 %v1825
    %1880 = vmatprep.subr.mxu0 0.0
    %1881 = vmatpush1.msra.mxu0 %v1824
    %1882 = vmatprep.subr.mxu0 0.0
    %1883 = vmatpush1.msra.mxu0 %v1823
    %1884 = vmatprep.subr.mxu0 0.0
    %1885 = vmatpush1.msra.mxu0 %v1822
    %1886 = vmatprep.subr.mxu0 0.0
    %1887 = vmatpush1.msra.mxu0 %v1821
    %1888 = vmatprep.subr.mxu0 0.0
    %1889 = vmatpush1.msra.mxu0 %v1820
    %1890 = vmatprep.subr.mxu0 0.0
    %1891 = vmatpush2.msra.mxu0 0.0
    %1892 = vmatprep.subr.mxu0 0.0
    %1893 = vmatpush2.msra.mxu0 0.0
    %1894 = vmatprep.subr.mxu0 0.0
    %1895 = vmatpush2.msra.mxu0 0.0
    %1896 = vmatprep.subr.mxu0 0.0
    %1897 = vmatpush2.msra.mxu0 0.0
    %1898 = vmatprep.subr.mxu0 0.0
    %1899 = vmatpush2.msra.mxu0 %v1847
    %1900 = vmatprep.subr.mxu0 0.0
    %1901 = vmatpush2.msra.mxu0 %v1846
    %1902 = vmatprep.subr.mxu0 0.0
    %1903 = vmatpush2.msra.mxu0 %v1845
    %1904 = vmatprep.subr.mxu0 0.0
    %1905 = vmatpush2.msra.mxu0 %v1844
    %1906 = vmatprep.subr.mxu0 0.0
    %1907 = vmatpush2.msra.mxu0 %v1843
    %1908 = vmatprep.subr.mxu0 0.0
    %1909 = vmatpush2.msra.mxu0 %v1842
    %1910 = vmatprep.subr.mxu0 0.0
    %1911 = vmatpush2.msra.mxu0 %v1841
    %1912 = vmatprep.subr.mxu0 0.0
    %1913 = vmatpush2.msra.mxu0 %v1840
    %1914 = vmatprep.subr.mxu0 0.0
    %1915 = vmatpush2.msra.mxu0 %v1839
    %1916 = vmatprep.subr.mxu0 0.0
    %1917 = vmatpush2.msra.mxu0 %v1838
    %1918 = vmatprep.subr.mxu0 0.0
    %1919 = vmatpush2.msra.mxu0 %v1837
    %1920 = vmatprep.subr.mxu0 0.0
    %1921 = vmatpush2.msra.mxu0 %v1836
    %1922 = vmatprep.mubr.f32.mxu0 %v1856
    %1923 = vmatmul.mubr.f32.gmra.mxu0 %v1818
    %v1924 = vpop.f32.mrf.mxu0
    %v1925 = vadd.f32 %v1853, %v1924
    %v1926 = vpop.f32.mrf.mxu0
    %1927 = vdwg.mxu0
    %1928 = vst [vmem:[#allocation10] sm:$0xff] %v1925
    // Predicated region
    $region50: #{tpu_custom_call.1} parent=1 // pred_check
      _
    $region51: #{tpu_custom_call.1} parent=1 // pred_check_branch
      %1930 = sbr.rel (0) target = $region53
    $region52: #{tpu_custom_call.1} parent=1 // pred_region
      %s1932 = ssub.s32 128, 128
      %1933 = vsyncadd [#allocation6], %s1932
      %s1935 = sshll.u32 [#allocation10], 4
      %s1936 = int_to_ptr.vmem [resolvable:$true] %s1935
      %1938 = dma.vmem_to_hbm [thread:$0]  %s1936, 128, %s9, [#allocation6]
    $region53: #{tpu_custom_call.1} parent=1 // pred_fallthru
      _
    // Predicated region
    $region54: #{tpu_custom_call.1} parent=1 // pred_check
      _
    $region55: #{tpu_custom_call.1} parent=1 // pred_check_branch
      %1940 = sbr.rel (0) target = $region57
    $region56: #{tpu_custom_call.1} parent=1 // pred_region
      %1941 = dma.done [#allocation6], 128
    $region57: #{tpu_custom_call.1} parent=1 // pred_fallthru
      _
    %1942 = vsyncpa [#allocation5], 1
    %1943 = vsyncpa [#allocation8], 1
    %1944 = vsyncpa [#allocation6], 1

</llo_original>
